<compile_context>
chip_gen: v5e
topology: v5e:2x2
jax: 0.10.0
libtpu: 0.0.40
codegen_flags: <defaults>
</compile_context>

<pallas_src>
import jax
import jax.numpy as jnp
from jax.experimental import pallas as pl
from jax.experimental.pallas import tpu as pltpu

NUM_CONV = 4
EPS = 1e-5


def _make_kernel(B, H, W, C, num_conv):
    WC = W * C
    inv_n = 1.0 / float(B * H * W)

    def kernel(x_ref, wb_ref, bias_ref, gamma_ref, beta_ref, gsum_ref,
               o_ref, pad_ref):
        # x_ref:     (B, H, W*C)             lane-dense NHWC activations
        # wb_ref:    (num_conv*3, W*C, W*C)  banded conv weights (one per ky tap)
        # bias_ref:  (num_conv, W*C)         conv bias, tiled across x
        # gamma_ref: (num_conv, W*C)         BN scale, tiled across x
        # beta_ref:  (num_conv, W*C)         BN shift, tiled across x
        # gsum_ref:  (W*C, W*C)              per-channel group-sum matrix
        # o_ref:     (B, H, W*C)
        # pad_ref:   (B, H+2, W*C)           vertically padded activation scratch

        # Zero only the vertical halo rows, exactly once; the interior is fully
        # overwritten every conv iteration.
        pad_ref[:, 0:1, :] = jnp.zeros((B, 1, WC), jnp.float32)
        pad_ref[:, H + 1:H + 2, :] = jnp.zeros((B, 1, WC), jnp.float32)

        cur3 = x_ref[...].astype(jnp.float32)     # outs[i], shape (B, H, WC)
        run_sum = None                            # sum_{j<i} outs[j], (B*H, WC)

        for i in range(num_conv):
            # Current activation into the padded interior (lane-aligned store).
            pad_ref[:, 1:H + 1, :] = cur3

            # 3x3 SAME conv: 3 banded matmuls (horizontal zero-pad is implicit
            # in the band structure, vertical pad comes from the halo rows).
            acc = jnp.zeros((B * H, WC), jnp.float32)
            for ky in range(3):
                slab = pad_ref[:, ky:ky + H, :].reshape(B * H, WC)
                acc = acc + jnp.dot(slab, wb_ref[i * 3 + ky],
                                    preferred_element_type=jnp.float32)
            acc = acc + bias_ref[i:i + 1, :]

            # Dense residual connections: += sum_{j<i} outs[j]  (prefix sum).
            if i > 0:
                acc = acc + run_sum

            # BatchNorm2d (batch statistics, biased variance) fused with ReLU.
            col_sum = jnp.sum(acc, axis=0, keepdims=True)           # (1, WC)
            col_sq = jnp.sum(acc * acc, axis=0, keepdims=True)      # (1, WC)
            ch_sum = jnp.dot(col_sum, gsum_ref[...],
                             preferred_element_type=jnp.float32)    # per-ch, bcast
            ch_sq = jnp.dot(col_sq, gsum_ref[...],
                            preferred_element_type=jnp.float32)
            mean = ch_sum * inv_n
            var = ch_sq * inv_n - mean * mean
            scale = gamma_ref[i:i + 1, :] * jax.lax.rsqrt(var + EPS)
            shift = beta_ref[i:i + 1, :] - mean * scale
            y = jnp.maximum(acc * scale + shift, 0.0)               # (B*H, WC)

            # Update prefix sum with this iteration's *input* activation.
            cur_flat = cur3.reshape(B * H, WC)
            run_sum = cur_flat if i == 0 else run_sum + cur_flat
            cur3 = y.reshape(B, H, WC)

        o_ref[...] = cur3.astype(o_ref.dtype)

    return kernel


def single_level_densenet(x_nchw, w_pt, b, gamma, beta):
    """x_nchw: (B, C, H, W); w_pt: (num_conv, Cout, Cin, 3, 3) — PyTorch layout."""
    B, C, H, W = x_nchw.shape
    num_conv = w_pt.shape[0]
    WC = W * C

    # NCHW -> lane-dense (B, H, W*C)
    x = jnp.transpose(x_nchw, (0, 2, 3, 1)).reshape(B, H, WC)

    # Banded weights: band[(x+dx)*C + ci, x*C + co] = w_pt[i, co, ci, ky, dx+1];
    # out-of-range x+dx rows are simply absent -> implicit horizontal zero-pad.
    eye_shift = [jnp.eye(W, k=-dx, dtype=jnp.float32) for dx in (-1, 0, 1)]
    bands = []
    for i in range(num_conv):
        for ky in range(3):
            band = jnp.zeros((WC, WC), jnp.float32)
            for kx in range(3):
                dx = kx - 1
                tap = jnp.transpose(w_pt[i, :, :, ky, kx])     # (Cin, Cout)
                band = band + jnp.kron(eye_shift[dx + 1], tap)
            bands.append(band)
    wb = jnp.stack(bands, axis=0)                              # (num_conv*3, WC, WC)

    # Per-channel parameters tiled to the lane-dense layout: lane x*C+c -> value[c].
    bias_t = jnp.tile(b, (1, W)).astype(jnp.float32)           # (num_conv, WC)
    gamma_t = jnp.tile(gamma, (1, W)).astype(jnp.float32)
    beta_t = jnp.tile(beta, (1, W)).astype(jnp.float32)

    # Group-sum matrix: G[x*C+c, x'*C+c'] = (c == c')  -> sums over x, broadcasts back.
    gsum = jnp.kron(jnp.ones((W, W), jnp.float32), jnp.eye(C, dtype=jnp.float32))

    kernel = _make_kernel(B, H, W, C, num_conv)
    out = pl.pallas_call(
        kernel,
        out_shape=jax.ShapeDtypeStruct((B, H, WC), jnp.float32),
        in_specs=[pl.BlockSpec(memory_space=pltpu.MemorySpace.VMEM)] * 6,
        out_specs=pl.BlockSpec(memory_space=pltpu.MemorySpace.VMEM),
        scratch_shapes=[pltpu.VMEM((B, H + 2, WC), jnp.float32)],
    )(x, wb, bias_t, gamma_t, beta_t, gsum)

    # (B, H, W*C) -> NCHW
    return jnp.transpose(out.reshape(B, H, W, C), (0, 3, 1, 2))


def reference_forward(x_nchw, w_pt, b, gamma, beta):
    """Pure-JAX (XLA) reference matching the PyTorch forward (training-mode BN)."""
    num_conv = w_pt.shape[0]
    outs = [x_nchw]
    for i in range(num_conv):
        t = jax.lax.conv_general_dilated(
            outs[i], w_pt[i], window_strides=(1, 1), padding="SAME",
            dimension_numbers=("NCHW", "OIHW", "NCHW"))
        t = t + b[i][None, :, None, None]
        for j in range(i):
            t = t + outs[j]
        mean = jnp.mean(t, axis=(0, 2, 3), keepdims=True)
        var = jnp.mean((t - mean) ** 2, axis=(0, 2, 3), keepdims=True)
        y = gamma[i][None, :, None, None] * (t - mean) / jnp.sqrt(var + EPS) \
            + beta[i][None, :, None, None]
        outs.append(jnp.maximum(y, 0.0))
    return outs[-1]


if __name__ == "__main__":
    B, C, H, W = 2, 8, 16, 16  # filters = 8  (W*C = 128 -> exactly one lane row)
    key = jax.random.PRNGKey(0)
    kx, kw, kb, kg, kbe = jax.random.split(key, 5)

    x = jax.random.normal(kx, (B, C, H, W), dtype=jnp.float32)
    # Deterministic synthetic parameters (PyTorch conv weight layout O,I,KH,KW).
    w_pt = 0.1 * jax.random.normal(kw, (NUM_CONV, C, C, 3, 3), dtype=jnp.float32)
    b = 0.1 * jax.random.normal(kb, (NUM_CONV, C), dtype=jnp.float32)
    gamma = 1.0 + 0.1 * jax.random.normal(kg, (NUM_CONV, C), dtype=jnp.float32)
    beta = 0.1 * jax.random.normal(kbe, (NUM_CONV, C), dtype=jnp.float32)

    out = single_level_densenet(x, w_pt, b, gamma, beta)
    out = jax.block_until_ready(out)

    ref = jax.block_until_ready(reference_forward(x, w_pt, b, gamma, beta))
    assert out.shape == (B, C, H, W)
    assert jnp.allclose(out, ref, atol=1e-3, rtol=1e-3), float(jnp.max(jnp.abs(out - ref)))

    print("KERNEL_OK")
</pallas_src>

<mosaic_0001>
module attributes {stable_mosaic.version = 11 : i64} {
  func.func @kernel(%arg0: memref<2x16x128xf32, #tpu.memory_space<vmem>>, %arg1: memref<12x128x128xf32, #tpu.memory_space<vmem>>, %arg2: memref<4x128xf32, #tpu.memory_space<vmem>>, %arg3: memref<4x128xf32, #tpu.memory_space<vmem>>, %arg4: memref<4x128xf32, #tpu.memory_space<vmem>>, %arg5: memref<128x128xf32, #tpu.memory_space<vmem>>, %arg6: memref<2x16x128xf32, #tpu.memory_space<vmem>>, %arg7: memref<2x18x128xf32, #tpu.memory_space<vmem>>) attributes {dimension_semantics = [], scalar_prefetch = 0 : i64, scratch_operands = 1 : i64, tpu.core_type = #tpu.core_type<tc>} {
    %cst = arith.constant 0.000000e+00 : f32
    %0 = vector.broadcast %cst : f32 to vector<2x1x128xf32>
    %c0 = arith.constant 0 : index
    %c0_0 = arith.constant 0 : index
    %c0_1 = arith.constant 0 : index
    %1 = vector.load %arg7[%c0, %c0_0, %c0_1] : memref<2x18x128xf32, #tpu.memory_space<vmem>>, vector<2x1x128xf32>
    tpu.vector_store %arg7[%c0, %c0_0, %c0_1], %0 {strides = array<i32>} : memref<2x18x128xf32, #tpu.memory_space<vmem>>, vector<2x1x128xf32>,
    %cst_2 = arith.constant 0.000000e+00 : f32
    %2 = vector.broadcast %cst_2 : f32 to vector<2x1x128xf32>
    %c0_3 = arith.constant 0 : index
    %c17 = arith.constant 17 : index
    %c0_4 = arith.constant 0 : index
    %3 = vector.load %arg7[%c0_3, %c17, %c0_4] : memref<2x18x128xf32, #tpu.memory_space<vmem>>, vector<2x1x128xf32>
    tpu.vector_store %arg7[%c0_3, %c17, %c0_4], %2 {strides = array<i32>} : memref<2x18x128xf32, #tpu.memory_space<vmem>>, vector<2x1x128xf32>,
    %c0_5 = arith.constant 0 : index
    %c0_6 = arith.constant 0 : index
    %c0_7 = arith.constant 0 : index
    %4 = vector.load %arg0[%c0_5, %c0_6, %c0_7] : memref<2x16x128xf32, #tpu.memory_space<vmem>>, vector<2x16x128xf32>
    %c0_8 = arith.constant 0 : index
    %c1 = arith.constant 1 : index
    %c0_9 = arith.constant 0 : index
    %5 = vector.load %arg7[%c0_8, %c1, %c0_9] : memref<2x18x128xf32, #tpu.memory_space<vmem>>, vector<2x16x128xf32>
    tpu.vector_store %arg7[%c0_8, %c1, %c0_9], %4 {strides = array<i32>} : memref<2x18x128xf32, #tpu.memory_space<vmem>>, vector<2x16x128xf32>,
    %cst_10 = arith.constant 0.000000e+00 : f32
    %6 = vector.broadcast %cst_10 : f32 to vector<32x128xf32>
    %c0_11 = arith.constant 0 : index
    %c0_12 = arith.constant 0 : index
    %c0_13 = arith.constant 0 : index
    %7 = vector.load %arg7[%c0_11, %c0_12, %c0_13] : memref<2x18x128xf32, #tpu.memory_space<vmem>>, vector<2x16x128xf32>
    %8 = vector.shape_cast %7 : vector<2x16x128xf32> to vector<32x128xf32>
    %c0_14 = arith.constant 0 : index
    %c0_15 = arith.constant 0 : index
    %c0_16 = arith.constant 0 : index
    %9 = vector.load %arg1[%c0_14, %c0_15, %c0_16] : memref<12x128x128xf32, #tpu.memory_space<vmem>>, vector<1x128x128xf32>
    %10 = vector.shape_cast %9 : vector<1x128x128xf32> to vector<128x128xf32>
    %cst_17 = arith.constant dense<0.000000e+00> : vector<32x128xf32>
    %11 = tpu.matmul %8, %10, %cst_17 {dimension_numbers = #tpu.dot_dimension_numbers<[1], [0], [0], [1], [0, 0, 1, 1], [], []>} : vector<32x128xf32>, vector<128x128xf32>, vector<32x128xf32> -> vector<32x128xf32>
    %12 = arith.addf %6, %11 : vector<32x128xf32>
    %c0_18 = arith.constant 0 : index
    %c1_19 = arith.constant 1 : index
    %c0_20 = arith.constant 0 : index
    %13 = vector.load %arg7[%c0_18, %c1_19, %c0_20] : memref<2x18x128xf32, #tpu.memory_space<vmem>>, vector<2x16x128xf32>
    %14 = vector.shape_cast %13 : vector<2x16x128xf32> to vector<32x128xf32>
    %c1_21 = arith.constant 1 : index
    %c0_22 = arith.constant 0 : index
    %c0_23 = arith.constant 0 : index
    %15 = vector.load %arg1[%c1_21, %c0_22, %c0_23] : memref<12x128x128xf32, #tpu.memory_space<vmem>>, vector<1x128x128xf32>
    %16 = vector.shape_cast %15 : vector<1x128x128xf32> to vector<128x128xf32>
    %cst_24 = arith.constant dense<0.000000e+00> : vector<32x128xf32>
    %17 = tpu.matmul %14, %16, %cst_24 {dimension_numbers = #tpu.dot_dimension_numbers<[1], [0], [0], [1], [0, 0, 1, 1], [], []>} : vector<32x128xf32>, vector<128x128xf32>, vector<32x128xf32> -> vector<32x128xf32>
    %18 = arith.addf %12, %17 : vector<32x128xf32>
    %c0_25 = arith.constant 0 : index
    %c2 = arith.constant 2 : index
    %c0_26 = arith.constant 0 : index
    %19 = vector.load %arg7[%c0_25, %c2, %c0_26] : memref<2x18x128xf32, #tpu.memory_space<vmem>>, vector<2x16x128xf32>
    %20 = vector.shape_cast %19 : vector<2x16x128xf32> to vector<32x128xf32>
    %c2_27 = arith.constant 2 : index
    %c0_28 = arith.constant 0 : index
    %c0_29 = arith.constant 0 : index
    %21 = vector.load %arg1[%c2_27, %c0_28, %c0_29] : memref<12x128x128xf32, #tpu.memory_space<vmem>>, vector<1x128x128xf32>
    %22 = vector.shape_cast %21 : vector<1x128x128xf32> to vector<128x128xf32>
    %cst_30 = arith.constant dense<0.000000e+00> : vector<32x128xf32>
    %23 = tpu.matmul %20, %22, %cst_30 {dimension_numbers = #tpu.dot_dimension_numbers<[1], [0], [0], [1], [0, 0, 1, 1], [], []>} : vector<32x128xf32>, vector<128x128xf32>, vector<32x128xf32> -> vector<32x128xf32>
    %24 = arith.addf %18, %23 : vector<32x128xf32>
    %c0_31 = arith.constant 0 : index
    %c0_32 = arith.constant 0 : index
    %25 = vector.load %arg2[%c0_31, %c0_32] : memref<4x128xf32, #tpu.memory_space<vmem>>, vector<1x128xf32>
    %26 = vector.broadcast %25 : vector<1x128xf32> to vector<32x128xf32>
    %27 = arith.addf %24, %26 : vector<32x128xf32>
    %cst_33 = arith.constant dense<0.000000e+00> : vector<128xf32>
    %28 = vector.multi_reduction <add>, %27, %cst_33 [0] : vector<32x128xf32> to vector<128xf32>
    %29 = vector.shape_cast %28 : vector<128xf32> to vector<1x128xf32>
    %30 = arith.mulf %27, %27 : vector<32x128xf32>
    %cst_34 = arith.constant dense<0.000000e+00> : vector<128xf32>
    %31 = vector.multi_reduction <add>, %30, %cst_34 [0] : vector<32x128xf32> to vector<128xf32>
    %32 = vector.shape_cast %31 : vector<128xf32> to vector<1x128xf32>
    %c0_35 = arith.constant 0 : index
    %c0_36 = arith.constant 0 : index
    %33 = vector.load %arg5[%c0_35, %c0_36] : memref<128x128xf32, #tpu.memory_space<vmem>>, vector<128x128xf32>
    %cst_37 = arith.constant dense<0.000000e+00> : vector<1x128xf32>
    %34 = tpu.matmul %29, %33, %cst_37 {dimension_numbers = #tpu.dot_dimension_numbers<[1], [0], [0], [1], [0, 0, 1, 1], [], []>} : vector<1x128xf32>, vector<128x128xf32>, vector<1x128xf32> -> vector<1x128xf32>
    %c0_38 = arith.constant 0 : index
    %c0_39 = arith.constant 0 : index
    %35 = vector.load %arg5[%c0_38, %c0_39] : memref<128x128xf32, #tpu.memory_space<vmem>>, vector<128x128xf32>
    %cst_40 = arith.constant dense<0.000000e+00> : vector<1x128xf32>
    %36 = tpu.matmul %32, %35, %cst_40 {dimension_numbers = #tpu.dot_dimension_numbers<[1], [0], [0], [1], [0, 0, 1, 1], [], []>} : vector<1x128xf32>, vector<128x128xf32>, vector<1x128xf32> -> vector<1x128xf32>
    %cst_41 = arith.constant 0.001953125 : f32
    %37 = vector.broadcast %cst_41 : f32 to vector<1x128xf32>
    %38 = arith.mulf %34, %37 : vector<1x128xf32>
    %cst_42 = arith.constant 0.001953125 : f32
    %39 = vector.broadcast %cst_42 : f32 to vector<1x128xf32>
    %40 = arith.mulf %36, %39 : vector<1x128xf32>
    %41 = arith.mulf %38, %38 : vector<1x128xf32>
    %42 = arith.subf %40, %41 : vector<1x128xf32>
    %c0_43 = arith.constant 0 : index
    %c0_44 = arith.constant 0 : index
    %43 = vector.load %arg3[%c0_43, %c0_44] : memref<4x128xf32, #tpu.memory_space<vmem>>, vector<1x128xf32>
    %cst_45 = arith.constant 9.99999974E-6 : f32
    %44 = vector.broadcast %cst_45 : f32 to vector<1x128xf32>
    %45 = arith.addf %42, %44 : vector<1x128xf32>
    %46 = math.rsqrt %45 : vector<1x128xf32>
    %47 = arith.mulf %43, %46 : vector<1x128xf32>
    %c0_46 = arith.constant 0 : index
    %c0_47 = arith.constant 0 : index
    %48 = vector.load %arg4[%c0_46, %c0_47] : memref<4x128xf32, #tpu.memory_space<vmem>>, vector<1x128xf32>
    %49 = arith.mulf %38, %47 : vector<1x128xf32>
    %50 = arith.subf %48, %49 : vector<1x128xf32>
    %51 = vector.broadcast %47 : vector<1x128xf32> to vector<32x128xf32>
    %52 = arith.mulf %27, %51 : vector<32x128xf32>
    %53 = vector.broadcast %50 : vector<1x128xf32> to vector<32x128xf32>
    %54 = arith.addf %52, %53 : vector<32x128xf32>
    %cst_48 = arith.constant 0.000000e+00 : f32
    %55 = vector.broadcast %cst_48 : f32 to vector<32x128xf32>
    %56 = arith.maximumf %54, %55 : vector<32x128xf32>
    %57 = vector.shape_cast %4 : vector<2x16x128xf32> to vector<32x128xf32>
    %58 = vector.shape_cast %56 : vector<32x128xf32> to vector<2x16x128xf32>
    %c0_49 = arith.constant 0 : index
    %c1_50 = arith.constant 1 : index
    %c0_51 = arith.constant 0 : index
    %59 = vector.load %arg7[%c0_49, %c1_50, %c0_51] : memref<2x18x128xf32, #tpu.memory_space<vmem>>, vector<2x16x128xf32>
    tpu.vector_store %arg7[%c0_49, %c1_50, %c0_51], %58 {strides = array<i32>} : memref<2x18x128xf32, #tpu.memory_space<vmem>>, vector<2x16x128xf32>,
    %cst_52 = arith.constant 0.000000e+00 : f32
    %60 = vector.broadcast %cst_52 : f32 to vector<32x128xf32>
    %c0_53 = arith.constant 0 : index
    %c0_54 = arith.constant 0 : index
    %c0_55 = arith.constant 0 : index
    %61 = vector.load %arg7[%c0_53, %c0_54, %c0_55] : memref<2x18x128xf32, #tpu.memory_space<vmem>>, vector<2x16x128xf32>
    %62 = vector.shape_cast %61 : vector<2x16x128xf32> to vector<32x128xf32>
    %c3 = arith.constant 3 : index
    %c0_56 = arith.constant 0 : index
    %c0_57 = arith.constant 0 : index
    %63 = vector.load %arg1[%c3, %c0_56, %c0_57] : memref<12x128x128xf32, #tpu.memory_space<vmem>>, vector<1x128x128xf32>
    %64 = vector.shape_cast %63 : vector<1x128x128xf32> to vector<128x128xf32>
    %cst_58 = arith.constant dense<0.000000e+00> : vector<32x128xf32>
    %65 = tpu.matmul %62, %64, %cst_58 {dimension_numbers = #tpu.dot_dimension_numbers<[1], [0], [0], [1], [0, 0, 1, 1], [], []>} : vector<32x128xf32>, vector<128x128xf32>, vector<32x128xf32> -> vector<32x128xf32>
    %66 = arith.addf %60, %65 : vector<32x128xf32>
    %c0_59 = arith.constant 0 : index
    %c1_60 = arith.constant 1 : index
    %c0_61 = arith.constant 0 : index
    %67 = vector.load %arg7[%c0_59, %c1_60, %c0_61] : memref<2x18x128xf32, #tpu.memory_space<vmem>>, vector<2x16x128xf32>
    %68 = vector.shape_cast %67 : vector<2x16x128xf32> to vector<32x128xf32>
    %c4 = arith.constant 4 : index
    %c0_62 = arith.constant 0 : index
    %c0_63 = arith.constant 0 : index
    %69 = vector.load %arg1[%c4, %c0_62, %c0_63] : memref<12x128x128xf32, #tpu.memory_space<vmem>>, vector<1x128x128xf32>
    %70 = vector.shape_cast %69 : vector<1x128x128xf32> to vector<128x128xf32>
    %cst_64 = arith.constant dense<0.000000e+00> : vector<32x128xf32>
    %71 = tpu.matmul %68, %70, %cst_64 {dimension_numbers = #tpu.dot_dimension_numbers<[1], [0], [0], [1], [0, 0, 1, 1], [], []>} : vector<32x128xf32>, vector<128x128xf32>, vector<32x128xf32> -> vector<32x128xf32>
    %72 = arith.addf %66, %71 : vector<32x128xf32>
    %c0_65 = arith.constant 0 : index
    %c2_66 = arith.constant 2 : index
    %c0_67 = arith.constant 0 : index
    %73 = vector.load %arg7[%c0_65, %c2_66, %c0_67] : memref<2x18x128xf32, #tpu.memory_space<vmem>>, vector<2x16x128xf32>
    %74 = vector.shape_cast %73 : vector<2x16x128xf32> to vector<32x128xf32>
    %c5 = arith.constant 5 : index
    %c0_68 = arith.constant 0 : index
    %c0_69 = arith.constant 0 : index
    %75 = vector.load %arg1[%c5, %c0_68, %c0_69] : memref<12x128x128xf32, #tpu.memory_space<vmem>>, vector<1x128x128xf32>
    %76 = vector.shape_cast %75 : vector<1x128x128xf32> to vector<128x128xf32>
    %cst_70 = arith.constant dense<0.000000e+00> : vector<32x128xf32>
    %77 = tpu.matmul %74, %76, %cst_70 {dimension_numbers = #tpu.dot_dimension_numbers<[1], [0], [0], [1], [0, 0, 1, 1], [], []>} : vector<32x128xf32>, vector<128x128xf32>, vector<32x128xf32> -> vector<32x128xf32>
    %78 = arith.addf %72, %77 : vector<32x128xf32>
    %c1_71 = arith.constant 1 : index
    %c0_72 = arith.constant 0 : index
    %79 = vector.load %arg2[%c1_71, %c0_72] : memref<4x128xf32, #tpu.memory_space<vmem>>, vector<1x128xf32>
    %80 = vector.broadcast %79 : vector<1x128xf32> to vector<32x128xf32>
    %81 = arith.addf %78, %80 : vector<32x128xf32>
    %82 = arith.addf %81, %57 : vector<32x128xf32>
    %cst_73 = arith.constant dense<0.000000e+00> : vector<128xf32>
    %83 = vector.multi_reduction <add>, %82, %cst_73 [0] : vector<32x128xf32> to vector<128xf32>
    %84 = vector.shape_cast %83 : vector<128xf32> to vector<1x128xf32>
    %85 = arith.mulf %82, %82 : vector<32x128xf32>
    %cst_74 = arith.constant dense<0.000000e+00> : vector<128xf32>
    %86 = vector.multi_reduction <add>, %85, %cst_74 [0] : vector<32x128xf32> to vector<128xf32>
    %87 = vector.shape_cast %86 : vector<128xf32> to vector<1x128xf32>
    %c0_75 = arith.constant 0 : index
    %c0_76 = arith.constant 0 : index
    %88 = vector.load %arg5[%c0_75, %c0_76] : memref<128x128xf32, #tpu.memory_space<vmem>>, vector<128x128xf32>
    %cst_77 = arith.constant dense<0.000000e+00> : vector<1x128xf32>
    %89 = tpu.matmul %84, %88, %cst_77 {dimension_numbers = #tpu.dot_dimension_numbers<[1], [0], [0], [1], [0, 0, 1, 1], [], []>} : vector<1x128xf32>, vector<128x128xf32>, vector<1x128xf32> -> vector<1x128xf32>
    %c0_78 = arith.constant 0 : index
    %c0_79 = arith.constant 0 : index
    %90 = vector.load %arg5[%c0_78, %c0_79] : memref<128x128xf32, #tpu.memory_space<vmem>>, vector<128x128xf32>
    %cst_80 = arith.constant dense<0.000000e+00> : vector<1x128xf32>
    %91 = tpu.matmul %87, %90, %cst_80 {dimension_numbers = #tpu.dot_dimension_numbers<[1], [0], [0], [1], [0, 0, 1, 1], [], []>} : vector<1x128xf32>, vector<128x128xf32>, vector<1x128xf32> -> vector<1x128xf32>
    %cst_81 = arith.constant 0.001953125 : f32
    %92 = vector.broadcast %cst_81 : f32 to vector<1x128xf32>
    %93 = arith.mulf %89, %92 : vector<1x128xf32>
    %cst_82 = arith.constant 0.001953125 : f32
    %94 = vector.broadcast %cst_82 : f32 to vector<1x128xf32>
    %95 = arith.mulf %91, %94 : vector<1x128xf32>
    %96 = arith.mulf %93, %93 : vector<1x128xf32>
    %97 = arith.subf %95, %96 : vector<1x128xf32>
    %c1_83 = arith.constant 1 : index
    %c0_84 = arith.constant 0 : index
    %98 = vector.load %arg3[%c1_83, %c0_84] : memref<4x128xf32, #tpu.memory_space<vmem>>, vector<1x128xf32>
    %cst_85 = arith.constant 9.99999974E-6 : f32
    %99 = vector.broadcast %cst_85 : f32 to vector<1x128xf32>
    %100 = arith.addf %97, %99 : vector<1x128xf32>
    %101 = math.rsqrt %100 : vector<1x128xf32>
    %102 = arith.mulf %98, %101 : vector<1x128xf32>
    %c1_86 = arith.constant 1 : index
    %c0_87 = arith.constant 0 : index
    %103 = vector.load %arg4[%c1_86, %c0_87] : memref<4x128xf32, #tpu.memory_space<vmem>>, vector<1x128xf32>
    %104 = arith.mulf %93, %102 : vector<1x128xf32>
    %105 = arith.subf %103, %104 : vector<1x128xf32>
    %106 = vector.broadcast %102 : vector<1x128xf32> to vector<32x128xf32>
    %107 = arith.mulf %82, %106 : vector<32x128xf32>
    %108 = vector.broadcast %105 : vector<1x128xf32> to vector<32x128xf32>
    %109 = arith.addf %107, %108 : vector<32x128xf32>
    %cst_88 = arith.constant 0.000000e+00 : f32
    %110 = vector.broadcast %cst_88 : f32 to vector<32x128xf32>
    %111 = arith.maximumf %109, %110 : vector<32x128xf32>
    %112 = vector.shape_cast %58 : vector<2x16x128xf32> to vector<32x128xf32>
    %113 = arith.addf %57, %112 : vector<32x128xf32>
    %114 = vector.shape_cast %111 : vector<32x128xf32> to vector<2x16x128xf32>
    %c0_89 = arith.constant 0 : index
    %c1_90 = arith.constant 1 : index
    %c0_91 = arith.constant 0 : index
    %115 = vector.load %arg7[%c0_89, %c1_90, %c0_91] : memref<2x18x128xf32, #tpu.memory_space<vmem>>, vector<2x16x128xf32>
    tpu.vector_store %arg7[%c0_89, %c1_90, %c0_91], %114 {strides = array<i32>} : memref<2x18x128xf32, #tpu.memory_space<vmem>>, vector<2x16x128xf32>,
    %cst_92 = arith.constant 0.000000e+00 : f32
    %116 = vector.broadcast %cst_92 : f32 to vector<32x128xf32>
    %c0_93 = arith.constant 0 : index
    %c0_94 = arith.constant 0 : index
    %c0_95 = arith.constant 0 : index
    %117 = vector.load %arg7[%c0_93, %c0_94, %c0_95] : memref<2x18x128xf32, #tpu.memory_space<vmem>>, vector<2x16x128xf32>
    %118 = vector.shape_cast %117 : vector<2x16x128xf32> to vector<32x128xf32>
    %c6 = arith.constant 6 : index
    %c0_96 = arith.constant 0 : index
    %c0_97 = arith.constant 0 : index
    %119 = vector.load %arg1[%c6, %c0_96, %c0_97] : memref<12x128x128xf32, #tpu.memory_space<vmem>>, vector<1x128x128xf32>
    %120 = vector.shape_cast %119 : vector<1x128x128xf32> to vector<128x128xf32>
    %cst_98 = arith.constant dense<0.000000e+00> : vector<32x128xf32>
    %121 = tpu.matmul %118, %120, %cst_98 {dimension_numbers = #tpu.dot_dimension_numbers<[1], [0], [0], [1], [0, 0, 1, 1], [], []>} : vector<32x128xf32>, vector<128x128xf32>, vector<32x128xf32> -> vector<32x128xf32>
    %122 = arith.addf %116, %121 : vector<32x128xf32>
    %c0_99 = arith.constant 0 : index
    %c1_100 = arith.constant 1 : index
    %c0_101 = arith.constant 0 : index
    %123 = vector.load %arg7[%c0_99, %c1_100, %c0_101] : memref<2x18x128xf32, #tpu.memory_space<vmem>>, vector<2x16x128xf32>
    %124 = vector.shape_cast %123 : vector<2x16x128xf32> to vector<32x128xf32>
    %c7 = arith.constant 7 : index
    %c0_102 = arith.constant 0 : index
    %c0_103 = arith.constant 0 : index
    %125 = vector.load %arg1[%c7, %c0_102, %c0_103] : memref<12x128x128xf32, #tpu.memory_space<vmem>>, vector<1x128x128xf32>
    %126 = vector.shape_cast %125 : vector<1x128x128xf32> to vector<128x128xf32>
    %cst_104 = arith.constant dense<0.000000e+00> : vector<32x128xf32>
    %127 = tpu.matmul %124, %126, %cst_104 {dimension_numbers = #tpu.dot_dimension_numbers<[1], [0], [0], [1], [0, 0, 1, 1], [], []>} : vector<32x128xf32>, vector<128x128xf32>, vector<32x128xf32> -> vector<32x128xf32>
    %128 = arith.addf %122, %127 : vector<32x128xf32>
    %c0_105 = arith.constant 0 : index
    %c2_106 = arith.constant 2 : index
    %c0_107 = arith.constant 0 : index
    %129 = vector.load %arg7[%c0_105, %c2_106, %c0_107] : memref<2x18x128xf32, #tpu.memory_space<vmem>>, vector<2x16x128xf32>
    %130 = vector.shape_cast %129 : vector<2x16x128xf32> to vector<32x128xf32>
    %c8 = arith.constant 8 : index
    %c0_108 = arith.constant 0 : index
    %c0_109 = arith.constant 0 : index
    %131 = vector.load %arg1[%c8, %c0_108, %c0_109] : memref<12x128x128xf32, #tpu.memory_space<vmem>>, vector<1x128x128xf32>
    %132 = vector.shape_cast %131 : vector<1x128x128xf32> to vector<128x128xf32>
    %cst_110 = arith.constant dense<0.000000e+00> : vector<32x128xf32>
    %133 = tpu.matmul %130, %132, %cst_110 {dimension_numbers = #tpu.dot_dimension_numbers<[1], [0], [0], [1], [0, 0, 1, 1], [], []>} : vector<32x128xf32>, vector<128x128xf32>, vector<32x128xf32> -> vector<32x128xf32>
    %134 = arith.addf %128, %133 : vector<32x128xf32>
    %c2_111 = arith.constant 2 : index
    %c0_112 = arith.constant 0 : index
    %135 = vector.load %arg2[%c2_111, %c0_112] : memref<4x128xf32, #tpu.memory_space<vmem>>, vector<1x128xf32>
    %136 = vector.broadcast %135 : vector<1x128xf32> to vector<32x128xf32>
    %137 = arith.addf %134, %136 : vector<32x128xf32>
    %138 = arith.addf %137, %113 : vector<32x128xf32>
    %cst_113 = arith.constant dense<0.000000e+00> : vector<128xf32>
    %139 = vector.multi_reduction <add>, %138, %cst_113 [0] : vector<32x128xf32> to vector<128xf32>
    %140 = vector.shape_cast %139 : vector<128xf32> to vector<1x128xf32>
    %141 = arith.mulf %138, %138 : vector<32x128xf32>
    %cst_114 = arith.constant dense<0.000000e+00> : vector<128xf32>
    %142 = vector.multi_reduction <add>, %141, %cst_114 [0] : vector<32x128xf32> to vector<128xf32>
    %143 = vector.shape_cast %142 : vector<128xf32> to vector<1x128xf32>
    %c0_115 = arith.constant 0 : index
    %c0_116 = arith.constant 0 : index
    %144 = vector.load %arg5[%c0_115, %c0_116] : memref<128x128xf32, #tpu.memory_space<vmem>>, vector<128x128xf32>
    %cst_117 = arith.constant dense<0.000000e+00> : vector<1x128xf32>
    %145 = tpu.matmul %140, %144, %cst_117 {dimension_numbers = #tpu.dot_dimension_numbers<[1], [0], [0], [1], [0, 0, 1, 1], [], []>} : vector<1x128xf32>, vector<128x128xf32>, vector<1x128xf32> -> vector<1x128xf32>
    %c0_118 = arith.constant 0 : index
    %c0_119 = arith.constant 0 : index
    %146 = vector.load %arg5[%c0_118, %c0_119] : memref<128x128xf32, #tpu.memory_space<vmem>>, vector<128x128xf32>
    %cst_120 = arith.constant dense<0.000000e+00> : vector<1x128xf32>
    %147 = tpu.matmul %143, %146, %cst_120 {dimension_numbers = #tpu.dot_dimension_numbers<[1], [0], [0], [1], [0, 0, 1, 1], [], []>} : vector<1x128xf32>, vector<128x128xf32>, vector<1x128xf32> -> vector<1x128xf32>
    %cst_121 = arith.constant 0.001953125 : f32
    %148 = vector.broadcast %cst_121 : f32 to vector<1x128xf32>
    %149 = arith.mulf %145, %148 : vector<1x128xf32>
    %cst_122 = arith.constant 0.001953125 : f32
    %150 = vector.broadcast %cst_122 : f32 to vector<1x128xf32>
    %151 = arith.mulf %147, %150 : vector<1x128xf32>
    %152 = arith.mulf %149, %149 : vector<1x128xf32>
    %153 = arith.subf %151, %152 : vector<1x128xf32>
    %c2_123 = arith.constant 2 : index
    %c0_124 = arith.constant 0 : index
    %154 = vector.load %arg3[%c2_123, %c0_124] : memref<4x128xf32, #tpu.memory_space<vmem>>, vector<1x128xf32>
    %cst_125 = arith.constant 9.99999974E-6 : f32
    %155 = vector.broadcast %cst_125 : f32 to vector<1x128xf32>
    %156 = arith.addf %153, %155 : vector<1x128xf32>
    %157 = math.rsqrt %156 : vector<1x128xf32>
    %158 = arith.mulf %154, %157 : vector<1x128xf32>
    %c2_126 = arith.constant 2 : index
    %c0_127 = arith.constant 0 : index
    %159 = vector.load %arg4[%c2_126, %c0_127] : memref<4x128xf32, #tpu.memory_space<vmem>>, vector<1x128xf32>
    %160 = arith.mulf %149, %158 : vector<1x128xf32>
    %161 = arith.subf %159, %160 : vector<1x128xf32>
    %162 = vector.broadcast %158 : vector<1x128xf32> to vector<32x128xf32>
    %163 = arith.mulf %138, %162 : vector<32x128xf32>
    %164 = vector.broadcast %161 : vector<1x128xf32> to vector<32x128xf32>
    %165 = arith.addf %163, %164 : vector<32x128xf32>
    %cst_128 = arith.constant 0.000000e+00 : f32
    %166 = vector.broadcast %cst_128 : f32 to vector<32x128xf32>
    %167 = arith.maximumf %165, %166 : vector<32x128xf32>
    %168 = vector.shape_cast %114 : vector<2x16x128xf32> to vector<32x128xf32>
    %169 = arith.addf %113, %168 : vector<32x128xf32>
    %170 = vector.shape_cast %167 : vector<32x128xf32> to vector<2x16x128xf32>
    %c0_129 = arith.constant 0 : index
    %c1_130 = arith.constant 1 : index
    %c0_131 = arith.constant 0 : index
    %171 = vector.load %arg7[%c0_129, %c1_130, %c0_131] : memref<2x18x128xf32, #tpu.memory_space<vmem>>, vector<2x16x128xf32>
    tpu.vector_store %arg7[%c0_129, %c1_130, %c0_131], %170 {strides = array<i32>} : memref<2x18x128xf32, #tpu.memory_space<vmem>>, vector<2x16x128xf32>,
    %cst_132 = arith.constant 0.000000e+00 : f32
    %172 = vector.broadcast %cst_132 : f32 to vector<32x128xf32>
    %c0_133 = arith.constant 0 : index
    %c0_134 = arith.constant 0 : index
    %c0_135 = arith.constant 0 : index
    %173 = vector.load %arg7[%c0_133, %c0_134, %c0_135] : memref<2x18x128xf32, #tpu.memory_space<vmem>>, vector<2x16x128xf32>
    %174 = vector.shape_cast %173 : vector<2x16x128xf32> to vector<32x128xf32>
    %c9 = arith.constant 9 : index
    %c0_136 = arith.constant 0 : index
    %c0_137 = arith.constant 0 : index
    %175 = vector.load %arg1[%c9, %c0_136, %c0_137] : memref<12x128x128xf32, #tpu.memory_space<vmem>>, vector<1x128x128xf32>
    %176 = vector.shape_cast %175 : vector<1x128x128xf32> to vector<128x128xf32>
    %cst_138 = arith.constant dense<0.000000e+00> : vector<32x128xf32>
    %177 = tpu.matmul %174, %176, %cst_138 {dimension_numbers = #tpu.dot_dimension_numbers<[1], [0], [0], [1], [0, 0, 1, 1], [], []>} : vector<32x128xf32>, vector<128x128xf32>, vector<32x128xf32> -> vector<32x128xf32>
    %178 = arith.addf %172, %177 : vector<32x128xf32>
    %c0_139 = arith.constant 0 : index
    %c1_140 = arith.constant 1 : index
    %c0_141 = arith.constant 0 : index
    %179 = vector.load %arg7[%c0_139, %c1_140, %c0_141] : memref<2x18x128xf32, #tpu.memory_space<vmem>>, vector<2x16x128xf32>
    %180 = vector.shape_cast %179 : vector<2x16x128xf32> to vector<32x128xf32>
    %c10 = arith.constant 10 : index
    %c0_142 = arith.constant 0 : index
    %c0_143 = arith.constant 0 : index
    %181 = vector.load %arg1[%c10, %c0_142, %c0_143] : memref<12x128x128xf32, #tpu.memory_space<vmem>>, vector<1x128x128xf32>
    %182 = vector.shape_cast %181 : vector<1x128x128xf32> to vector<128x128xf32>
    %cst_144 = arith.constant dense<0.000000e+00> : vector<32x128xf32>
    %183 = tpu.matmul %180, %182, %cst_144 {dimension_numbers = #tpu.dot_dimension_numbers<[1], [0], [0], [1], [0, 0, 1, 1], [], []>} : vector<32x128xf32>, vector<128x128xf32>, vector<32x128xf32> -> vector<32x128xf32>
    %184 = arith.addf %178, %183 : vector<32x128xf32>
    %c0_145 = arith.constant 0 : index
    %c2_146 = arith.constant 2 : index
    %c0_147 = arith.constant 0 : index
    %185 = vector.load %arg7[%c0_145, %c2_146, %c0_147] : memref<2x18x128xf32, #tpu.memory_space<vmem>>, vector<2x16x128xf32>
    %186 = vector.shape_cast %185 : vector<2x16x128xf32> to vector<32x128xf32>
    %c11 = arith.constant 11 : index
    %c0_148 = arith.constant 0 : index
    %c0_149 = arith.constant 0 : index
    %187 = vector.load %arg1[%c11, %c0_148, %c0_149] : memref<12x128x128xf32, #tpu.memory_space<vmem>>, vector<1x128x128xf32>
    %188 = vector.shape_cast %187 : vector<1x128x128xf32> to vector<128x128xf32>
    %cst_150 = arith.constant dense<0.000000e+00> : vector<32x128xf32>
    %189 = tpu.matmul %186, %188, %cst_150 {dimension_numbers = #tpu.dot_dimension_numbers<[1], [0], [0], [1], [0, 0, 1, 1], [], []>} : vector<32x128xf32>, vector<128x128xf32>, vector<32x128xf32> -> vector<32x128xf32>
    %190 = arith.addf %184, %189 : vector<32x128xf32>
    %c3_151 = arith.constant 3 : index
    %c0_152 = arith.constant 0 : index
    %191 = vector.load %arg2[%c3_151, %c0_152] : memref<4x128xf32, #tpu.memory_space<vmem>>, vector<1x128xf32>
    %192 = vector.broadcast %191 : vector<1x128xf32> to vector<32x128xf32>
    %193 = arith.addf %190, %192 : vector<32x128xf32>
    %194 = arith.addf %193, %169 : vector<32x128xf32>
    %cst_153 = arith.constant dense<0.000000e+00> : vector<128xf32>
    %195 = vector.multi_reduction <add>, %194, %cst_153 [0] : vector<32x128xf32> to vector<128xf32>
    %196 = vector.shape_cast %195 : vector<128xf32> to vector<1x128xf32>
    %197 = arith.mulf %194, %194 : vector<32x128xf32>
    %cst_154 = arith.constant dense<0.000000e+00> : vector<128xf32>
    %198 = vector.multi_reduction <add>, %197, %cst_154 [0] : vector<32x128xf32> to vector<128xf32>
    %199 = vector.shape_cast %198 : vector<128xf32> to vector<1x128xf32>
    %c0_155 = arith.constant 0 : index
    %c0_156 = arith.constant 0 : index
    %200 = vector.load %arg5[%c0_155, %c0_156] : memref<128x128xf32, #tpu.memory_space<vmem>>, vector<128x128xf32>
    %cst_157 = arith.constant dense<0.000000e+00> : vector<1x128xf32>
    %201 = tpu.matmul %196, %200, %cst_157 {dimension_numbers = #tpu.dot_dimension_numbers<[1], [0], [0], [1], [0, 0, 1, 1], [], []>} : vector<1x128xf32>, vector<128x128xf32>, vector<1x128xf32> -> vector<1x128xf32>
    %c0_158 = arith.constant 0 : index
    %c0_159 = arith.constant 0 : index
    %202 = vector.load %arg5[%c0_158, %c0_159] : memref<128x128xf32, #tpu.memory_space<vmem>>, vector<128x128xf32>
    %cst_160 = arith.constant dense<0.000000e+00> : vector<1x128xf32>
    %203 = tpu.matmul %199, %202, %cst_160 {dimension_numbers = #tpu.dot_dimension_numbers<[1], [0], [0], [1], [0, 0, 1, 1], [], []>} : vector<1x128xf32>, vector<128x128xf32>, vector<1x128xf32> -> vector<1x128xf32>
    %cst_161 = arith.constant 0.001953125 : f32
    %204 = vector.broadcast %cst_161 : f32 to vector<1x128xf32>
    %205 = arith.mulf %201, %204 : vector<1x128xf32>
    %cst_162 = arith.constant 0.001953125 : f32
    %206 = vector.broadcast %cst_162 : f32 to vector<1x128xf32>
    %207 = arith.mulf %203, %206 : vector<1x128xf32>
    %208 = arith.mulf %205, %205 : vector<1x128xf32>
    %209 = arith.subf %207, %208 : vector<1x128xf32>
    %c3_163 = arith.constant 3 : index
    %c0_164 = arith.constant 0 : index
    %210 = vector.load %arg3[%c3_163, %c0_164] : memref<4x128xf32, #tpu.memory_space<vmem>>, vector<1x128xf32>
    %cst_165 = arith.constant 9.99999974E-6 : f32
    %211 = vector.broadcast %cst_165 : f32 to vector<1x128xf32>
    %212 = arith.addf %209, %211 : vector<1x128xf32>
    %213 = math.rsqrt %212 : vector<1x128xf32>
    %214 = arith.mulf %210, %213 : vector<1x128xf32>
    %c3_166 = arith.constant 3 : index
    %c0_167 = arith.constant 0 : index
    %215 = vector.load %arg4[%c3_166, %c0_167] : memref<4x128xf32, #tpu.memory_space<vmem>>, vector<1x128xf32>
    %216 = arith.mulf %205, %214 : vector<1x128xf32>
    %217 = arith.subf %215, %216 : vector<1x128xf32>
    %218 = vector.broadcast %214 : vector<1x128xf32> to vector<32x128xf32>
    %219 = arith.mulf %194, %218 : vector<32x128xf32>
    %220 = vector.broadcast %217 : vector<1x128xf32> to vector<32x128xf32>
    %221 = arith.addf %219, %220 : vector<32x128xf32>
    %cst_168 = arith.constant 0.000000e+00 : f32
    %222 = vector.broadcast %cst_168 : f32 to vector<32x128xf32>
    %223 = arith.maximumf %221, %222 : vector<32x128xf32>
    %224 = vector.shape_cast %223 : vector<32x128xf32> to vector<2x16x128xf32>
    %c0_169 = arith.constant 0 : index
    %c0_170 = arith.constant 0 : index
    %c0_171 = arith.constant 0 : index
    %225 = vector.load %arg6[%c0_169, %c0_170, %c0_171] : memref<2x16x128xf32, #tpu.memory_space<vmem>>, vector<2x16x128xf32>
    tpu.vector_store %arg6[%c0_169, %c0_170, %c0_171], %224 {strides = array<i32>} : memref<2x16x128xf32, #tpu.memory_space<vmem>>, vector<2x16x128xf32>,
    return
  }
}

</mosaic_0001>

<llo_original>
// kernel: tpu_custom_call.1
$region0: #{tpu_custom_call.1}
  #allocation0 [shape = 'u32[]', space=smem, size = 0x4, offset = 0x4, fixed_abs, tag = 'smem constant byte address 0x4 - core index']
  #allocation1 [shape = 'u32[72,128]{1,0:T(1,128)}', space=vmem, size = 0x9000, scoped, tag = 'internal scratch']
  #allocation2 [shape = 'f32[2,18,128]{2,1,0:T(8,128)}', space=vmem, size = 0x6000, scoped, tag = 'scratch operand']
  %s0 = inlined_call_operand.hbm [shape: f32[2,16,128], index: 0, kind: input, shape index: {}]
  %s1 = inlined_call_operand.hbm [shape: f32[12,128,128], index: 1, kind: input, shape index: {}]
  %s2 = inlined_call_operand.hbm [shape: f32[4,128], index: 2, kind: input, shape index: {}]
  %s3 = inlined_call_operand.hbm [shape: f32[4,128], index: 3, kind: input, shape index: {}]
  %s4 = inlined_call_operand.hbm [shape: f32[4,128], index: 4, kind: input, shape index: {}]
  %s5 = inlined_call_operand.hbm [shape: f32[128,128], index: 5, kind: input, shape index: {}]
  %s6 = inlined_call_operand.hbm [shape: f32[2,16,128], index: 6, kind: output, shape index: {}]
  %s7 = sld [smem:[#allocation0]]
  $region58: #{tpu_custom_call.1} parent=0
    _
  %s9 = ssub.s32 1, %s7
  %s10 = scalar_select 0, %s9, %s7
  $region1: #{tpu_custom_call.1} parent=0
    #allocation3 [shape = 'u8[16384]{0}', space=vmem, size = 0x4000, scoped, tag = 'input window, operand 0, single buffered']
    #allocation4 [shape = 's32[1]{0}', space=sflag, size = 0x4, scoped, tag = 'scoped memory for tpu_custom_call.1']
    #allocation5 [shape = 's32[1]{0}', space=sflag, size = 0x4, scoped, tag = 'scoped memory for tpu_custom_call.1']
    #allocation6 [shape = 'u8[786432]{0}', space=vmem, size = 0xc0000, scoped, tag = 'input window, operand 1, single buffered']
    #allocation7 [shape = 's32[1]{0}', space=sflag, size = 0x4, scoped, tag = 'scoped memory for tpu_custom_call.1']
    #allocation8 [shape = 'u8[2048]{0}', space=vmem, size = 0x800, scoped, tag = 'input window, operand 2, single buffered']
    #allocation9 [shape = 'u8[2048]{0}', space=vmem, size = 0x800, scoped, tag = 'input window, operand 3, single buffered']
    #allocation10 [shape = 's32[1]{0}', space=sflag, size = 0x4, scoped, tag = 'scoped memory for tpu_custom_call.1']
    #allocation11 [shape = 'u8[2048]{0}', space=vmem, size = 0x800, scoped, tag = 'input window, operand 4, single buffered']
    #allocation12 [shape = 'u8[65536]{0}', space=vmem, size = 0x10000, scoped, tag = 'input window, operand 5, single buffered']
    #allocation13 [shape = 's32[1]{0}', space=sflag, size = 0x4, scoped, tag = 'scoped memory for tpu_custom_call.1']
    #allocation14 [shape = 'u8[16384]{0}', space=vmem, size = 0x4000, scoped, tag = 'output window, operand 0, single buffered']
    %11 = vsyncpa [#allocation4], 0
    %12 = vsyncpa [#allocation7], 0
    %13 = vsyncpa [#allocation10], 0
    %14 = vsyncpa [#allocation13], 0
    %15 = vsyncpa [#allocation5], 0
    // Predicated region
    $region2: #{tpu_custom_call.1} parent=1 // pred_check
      _
    $region3: #{tpu_custom_call.1} parent=1 // pred_check_branch
      %17 = sbr.rel (0) target = $region5
    $region4: #{tpu_custom_call.1} parent=1 // pred_region
      %19 = vsyncadd [#allocation4], 0
      %s20 = sshll.u32 %s0, 4
      %s21 = int_to_ptr.hbm [resolvable:$true] %s20
      %s22 = sshll.u32 [#allocation3], 4
      %s23 = int_to_ptr.vmem [resolvable:$true] %s22
      %28 = dma.hbm_to_vmem [thread:$0]  %s21, 512, %s23, [#allocation4], 128, 128, 8
    $region5: #{tpu_custom_call.1} parent=1 // pred_fallthru
      _
    // Predicated region
    $region6: #{tpu_custom_call.1} parent=1 // pred_check
      _
    $region7: #{tpu_custom_call.1} parent=1 // pred_check_branch
      %30 = sbr.rel (0) target = $region9
    $region8: #{tpu_custom_call.1} parent=1 // pred_region
      %32 = vsyncadd [#allocation7], 0
      %s33 = sshll.u32 %s1, 4
      %s34 = int_to_ptr.hbm [resolvable:$true] %s33
      %s35 = sshll.u32 [#allocation6], 4
      %s36 = int_to_ptr.vmem [resolvable:$true] %s35
      %41 = dma.hbm_to_vmem [thread:$0]  %s34, 24576, %s36, [#allocation7], 128, 128, 8
    $region9: #{tpu_custom_call.1} parent=1 // pred_fallthru
      _
    // Predicated region
    $region10: #{tpu_custom_call.1} parent=1 // pred_check
      _
    $region11: #{tpu_custom_call.1} parent=1 // pred_check_branch
      %43 = sbr.rel (0) target = $region13
    $region12: #{tpu_custom_call.1} parent=1 // pred_region
      %45 = vsyncadd [#allocation7], 0
      %s47 = sshll.u32 %s2, 4
      %s48 = int_to_ptr.hbm [resolvable:$true] %s47
      %s49 = sshll.u32 [#allocation8], 4
      %s50 = int_to_ptr.vmem [resolvable:$true] %s49
      %52 = dma.hbm_to_vmem [thread:$0]  %s48, 64, %s50, [#allocation7]
    $region13: #{tpu_custom_call.1} parent=1 // pred_fallthru
      _
    // Predicated region
    $region14: #{tpu_custom_call.1} parent=1 // pred_check
      _
    $region15: #{tpu_custom_call.1} parent=1 // pred_check_branch
      %54 = sbr.rel (0) target = $region17
    $region16: #{tpu_custom_call.1} parent=1 // pred_region
      %56 = vsyncadd [#allocation10], 0
      %s58 = sshll.u32 %s3, 4
      %s59 = int_to_ptr.hbm [resolvable:$true] %s58
      %s60 = sshll.u32 [#allocation9], 4
      %s61 = int_to_ptr.vmem [resolvable:$true] %s60
      %63 = dma.hbm_to_vmem [thread:$0]  %s59, 64, %s61, [#allocation10]
    $region17: #{tpu_custom_call.1} parent=1 // pred_fallthru
      _
    // Predicated region
    $region18: #{tpu_custom_call.1} parent=1 // pred_check
      _
    $region19: #{tpu_custom_call.1} parent=1 // pred_check_branch
      %65 = sbr.rel (0) target = $region21
    $region20: #{tpu_custom_call.1} parent=1 // pred_region
      %67 = vsyncadd [#allocation10], 0
      %s69 = sshll.u32 %s4, 4
      %s70 = int_to_ptr.hbm [resolvable:$true] %s69
      %s71 = sshll.u32 [#allocation11], 4
      %s72 = int_to_ptr.vmem [resolvable:$true] %s71
      %74 = dma.hbm_to_vmem [thread:$0]  %s70, 64, %s72, [#allocation10]
    $region21: #{tpu_custom_call.1} parent=1 // pred_fallthru
      _
    // Predicated region
    $region22: #{tpu_custom_call.1} parent=1 // pred_check
      _
    $region23: #{tpu_custom_call.1} parent=1 // pred_check_branch
      %76 = sbr.rel (0) target = $region25
    $region24: #{tpu_custom_call.1} parent=1 // pred_region
      %78 = vsyncadd [#allocation13], 0
      %s79 = sshll.u32 %s5, 4
      %s80 = int_to_ptr.hbm [resolvable:$true] %s79
      %s81 = sshll.u32 [#allocation12], 4
      %s82 = int_to_ptr.vmem [resolvable:$true] %s81
      %87 = dma.hbm_to_vmem [thread:$0]  %s80, 2048, %s82, [#allocation13], 128, 128, 8
    $region25: #{tpu_custom_call.1} parent=1 // pred_fallthru
      _
    // Predicated region
    $region26: #{tpu_custom_call.1} parent=1 // pred_check
      _
    $region27: #{tpu_custom_call.1} parent=1 // pred_check_branch
      %89 = sbr.rel (0) target = $region29
    $region28: #{tpu_custom_call.1} parent=1 // pred_region
      %91 = dma.done [#allocation4], 512
    $region29: #{tpu_custom_call.1} parent=1 // pred_fallthru
      _
    // Predicated region
    $region30: #{tpu_custom_call.1} parent=1 // pred_check
      _
    $region31: #{tpu_custom_call.1} parent=1 // pred_check_branch
      %93 = sbr.rel (0) target = $region33
    $region32: #{tpu_custom_call.1} parent=1 // pred_region
      %95 = dma.done [#allocation7], 24576
    $region33: #{tpu_custom_call.1} parent=1 // pred_fallthru
      _
    // Predicated region
    $region34: #{tpu_custom_call.1} parent=1 // pred_check
      _
    $region35: #{tpu_custom_call.1} parent=1 // pred_check_branch
      %97 = sbr.rel (0) target = $region37
    $region36: #{tpu_custom_call.1} parent=1 // pred_region
      %99 = dma.done [#allocation7], 64
    $region37: #{tpu_custom_call.1} parent=1 // pred_fallthru
      _
    // Predicated region
    $region38: #{tpu_custom_call.1} parent=1 // pred_check
      _
    $region39: #{tpu_custom_call.1} parent=1 // pred_check_branch
      %101 = sbr.rel (0) target = $region41
    $region40: #{tpu_custom_call.1} parent=1 // pred_region
      %103 = dma.done [#allocation10], 64
    $region41: #{tpu_custom_call.1} parent=1 // pred_fallthru
      _
    // Predicated region
    $region42: #{tpu_custom_call.1} parent=1 // pred_check
      _
    $region43: #{tpu_custom_call.1} parent=1 // pred_check_branch
      %105 = sbr.rel (0) target = $region45
    $region44: #{tpu_custom_call.1} parent=1 // pred_region
      %107 = dma.done [#allocation10], 64
    $region45: #{tpu_custom_call.1} parent=1 // pred_fallthru
      _
    // Predicated region
    $region46: #{tpu_custom_call.1} parent=1 // pred_check
      _
    $region47: #{tpu_custom_call.1} parent=1 // pred_check_branch
      %109 = sbr.rel (0) target = $region49
    $region48: #{tpu_custom_call.1} parent=1 // pred_region
      %111 = dma.done [#allocation13], 2048
    $region49: #{tpu_custom_call.1} parent=1 // pred_fallthru
      _
    %112 = vst [vmem:[#allocation2] sm:$0x1] 0.0
    %113 = vst [vmem:[#allocation2 + $0x18] sm:$0x1] 0.0
    %114 = vst [vmem:[#allocation2 + $0x11] sm:$0x1] 0.0
    %115 = vst [vmem:[#allocation2 + $0x29] sm:$0x1] 0.0
    %v116 = vld [vmem:[#allocation3] sm:$0xff]
    %v117 = vld [vmem:[#allocation3 + $0x8] sm:$0xff]
    %v118 = vld [vmem:[#allocation3 + $0x10] sm:$0xff]
    %v119 = vld [vmem:[#allocation3 + $0x18] sm:$0xff]
    %120 = vst [vmem:[#allocation2 + $0x1] sm:$0xff] %v116
    %121 = vst [vmem:[#allocation2 + $0x9] sm:$0xff] %v117
    %122 = vst [vmem:[#allocation2 + $0x19] sm:$0xff] %v118
    %123 = vst [vmem:[#allocation2 + $0x21] sm:$0xff] %v119
    %v124 = vld [vmem:[#allocation2] sm:$0xff]
    %v125 = vld [vmem:[#allocation2 + $0x8] sm:$0xff]
    %v126 = vld [vmem:[#allocation2 + $0x18] sm:$0xff]
    %v127 = vld [vmem:[#allocation2 + $0x20] sm:$0xff]
    %v128 = vld [vmem:[#allocation6] sm:$0xff]
    %v129 = vld [vmem:[#allocation6 + $0x8] sm:$0xff]
    %v130 = vld [vmem:[#allocation6 + $0x10] sm:$0xff]
    %v131 = vld [vmem:[#allocation6 + $0x18] sm:$0xff]
    %v132 = vld [vmem:[#allocation6 + $0x20] sm:$0xff]
    %v133 = vld [vmem:[#allocation6 + $0x28] sm:$0xff]
    %v134 = vld [vmem:[#allocation6 + $0x30] sm:$0xff]
    %v135 = vld [vmem:[#allocation6 + $0x38] sm:$0xff]
    %v136 = vld [vmem:[#allocation6 + $0x40] sm:$0xff]
    %v137 = vld [vmem:[#allocation6 + $0x48] sm:$0xff]
    %v138 = vld [vmem:[#allocation6 + $0x50] sm:$0xff]
    %v139 = vld [vmem:[#allocation6 + $0x58] sm:$0xff]
    %v140 = vld [vmem:[#allocation6 + $0x60] sm:$0xff]
    %v141 = vld [vmem:[#allocation6 + $0x68] sm:$0xff]
    %v142 = vld [vmem:[#allocation6 + $0x70] sm:$0xff]
    %v143 = vld [vmem:[#allocation6 + $0x78] sm:$0xff]
    %v144 = vld [vmem:[#allocation2 + $0x1] sm:$0xff]
    %v145 = vld [vmem:[#allocation2 + $0x9] sm:$0xff]
    %v146 = vld [vmem:[#allocation2 + $0x19] sm:$0xff]
    %v147 = vld [vmem:[#allocation2 + $0x21] sm:$0xff]
    %s148 = scalar_lea.vmem [#allocation6], 128
    %v149 = vld [vmem:[%s148] sm:$0xff]
    %v150 = vld [vmem:[%s148 + $0x8] sm:$0xff]
    %v151 = vld [vmem:[%s148 + $0x10] sm:$0xff]
    %v152 = vld [vmem:[%s148 + $0x18] sm:$0xff]
    %v153 = vld [vmem:[%s148 + $0x20] sm:$0xff]
    %v154 = vld [vmem:[%s148 + $0x28] sm:$0xff]
    %v155 = vld [vmem:[%s148 + $0x30] sm:$0xff]
    %v156 = vld [vmem:[%s148 + $0x38] sm:$0xff]
    %v157 = vld [vmem:[%s148 + $0x40] sm:$0xff]
    %v158 = vld [vmem:[%s148 + $0x48] sm:$0xff]
    %v159 = vld [vmem:[%s148 + $0x50] sm:$0xff]
    %v160 = vld [vmem:[%s148 + $0x58] sm:$0xff]
    %v161 = vld [vmem:[%s148 + $0x60] sm:$0xff]
    %v162 = vld [vmem:[%s148 + $0x68] sm:$0xff]
    %v163 = vld [vmem:[%s148 + $0x70] sm:$0xff]
    %v164 = vld [vmem:[%s148 + $0x78] sm:$0xff]
    %165 = vmatpush.msra.mxu0 %v164
    %166 = vmatpush.msra.mxu0 %v163
    %167 = vmatpush.msra.mxu0 %v162
    %168 = vmatpush.msra.mxu0 %v161
    %169 = vmatpush.msra.mxu0 %v160
    %170 = vmatpush.msra.mxu0 %v159
    %171 = vmatpush.msra.mxu0 %v158
    %172 = vmatpush.msra.mxu0 %v157
    %173 = vmatpush.msra.mxu0 %v156
    %174 = vmatpush.msra.mxu0 %v155
    %175 = vmatpush.msra.mxu0 %v154
    %176 = vmatpush.msra.mxu0 %v153
    %177 = vmatpush.msra.mxu0 %v152
    %178 = vmatpush.msra.mxu0 %v151
    %179 = vmatpush.msra.mxu0 %v150
    %180 = vmatpush.msra.mxu0 %v149
    %181 = vmatmul.f32.gmra.mxu0 %v144
    %v182 = vpop.f32.mrf.mxu0
    %v183 = vadd.f32 0.0, %v182
    %184 = vmatmul.f32.gmra.mxu0 %v145
    %v185 = vpop.f32.mrf.mxu0
    %v186 = vadd.f32 0.0, %v185
    %187 = vmatmul.f32.gmra.mxu0 %v146
    %v188 = vpop.f32.mrf.mxu0
    %v189 = vadd.f32 0.0, %v188
    %190 = vmatmul.f32.gmra.mxu0 %v147
    %v191 = vpop.f32.mrf.mxu0
    %v192 = vadd.f32 0.0, %v191
    %193 = vdwg.mxu0
    %194 = vmatpush.msra.mxu0 %v143
    %195 = vmatpush.msra.mxu0 %v142
    %196 = vmatpush.msra.mxu0 %v141
    %197 = vmatpush.msra.mxu0 %v140
    %198 = vmatpush.msra.mxu0 %v139
    %199 = vmatpush.msra.mxu0 %v138
    %200 = vmatpush.msra.mxu0 %v137
    %201 = vmatpush.msra.mxu0 %v136
    %202 = vmatpush.msra.mxu0 %v135
    %203 = vmatpush.msra.mxu0 %v134
    %204 = vmatpush.msra.mxu0 %v133
    %205 = vmatpush.msra.mxu0 %v132
    %206 = vmatpush.msra.mxu0 %v131
    %207 = vmatpush.msra.mxu0 %v130
    %208 = vmatpush.msra.mxu0 %v129
    %209 = vmatpush.msra.mxu0 %v128
    %210 = vmatmul.f32.gmra.mxu0 %v124
    %v211 = vpop.f32.mrf.mxu0
    %v212 = vadd.f32 %v183, %v211
    %213 = vmatmul.f32.gmra.mxu0 %v125
    %v214 = vpop.f32.mrf.mxu0
    %v215 = vadd.f32 %v186, %v214
    %216 = vmatmul.f32.gmra.mxu0 %v126
    %v217 = vpop.f32.mrf.mxu0
    %v218 = vadd.f32 %v189, %v217
    %219 = vmatmul.f32.gmra.mxu0 %v127
    %v220 = vpop.f32.mrf.mxu0
    %v221 = vadd.f32 %v192, %v220
    %222 = vdwg.mxu0
    %v223 = vld [vmem:[#allocation2 + $0x2] sm:$0xff]
    %v224 = vld [vmem:[#allocation2 + $0xa] sm:$0xff]
    %v225 = vld [vmem:[#allocation2 + $0x1a] sm:$0xff]
    %v226 = vld [vmem:[#allocation2 + $0x22] sm:$0xff]
    %s227 = scalar_lea.vmem [#allocation6], 256
    %v228 = vld [vmem:[%s227] sm:$0xff]
    %v229 = vld [vmem:[%s227 + $0x8] sm:$0xff]
    %v230 = vld [vmem:[%s227 + $0x10] sm:$0xff]
    %v231 = vld [vmem:[%s227 + $0x18] sm:$0xff]
    %v232 = vld [vmem:[%s227 + $0x20] sm:$0xff]
    %v233 = vld [vmem:[%s227 + $0x28] sm:$0xff]
    %v234 = vld [vmem:[%s227 + $0x30] sm:$0xff]
    %v235 = vld [vmem:[%s227 + $0x38] sm:$0xff]
    %v236 = vld [vmem:[%s227 + $0x40] sm:$0xff]
    %v237 = vld [vmem:[%s227 + $0x48] sm:$0xff]
    %v238 = vld [vmem:[%s227 + $0x50] sm:$0xff]
    %v239 = vld [vmem:[%s227 + $0x58] sm:$0xff]
    %v240 = vld [vmem:[%s227 + $0x60] sm:$0xff]
    %v241 = vld [vmem:[%s227 + $0x68] sm:$0xff]
    %v242 = vld [vmem:[%s227 + $0x70] sm:$0xff]
    %v243 = vld [vmem:[%s227 + $0x78] sm:$0xff]
    %244 = vmatpush.msra.mxu0 %v243
    %245 = vmatpush.msra.mxu0 %v242
    %246 = vmatpush.msra.mxu0 %v241
    %247 = vmatpush.msra.mxu0 %v240
    %248 = vmatpush.msra.mxu0 %v239
    %249 = vmatpush.msra.mxu0 %v238
    %250 = vmatpush.msra.mxu0 %v237
    %251 = vmatpush.msra.mxu0 %v236
    %252 = vmatpush.msra.mxu0 %v235
    %253 = vmatpush.msra.mxu0 %v234
    %254 = vmatpush.msra.mxu0 %v233
    %255 = vmatpush.msra.mxu0 %v232
    %256 = vmatpush.msra.mxu0 %v231
    %257 = vmatpush.msra.mxu0 %v230
    %258 = vmatpush.msra.mxu0 %v229
    %259 = vmatpush.msra.mxu0 %v228
    %260 = vmatmul.f32.gmra.mxu0 %v223
    %v261 = vpop.f32.mrf.mxu0
    %v262 = vadd.f32 0.0, %v261
    %263 = vmatmul.f32.gmra.mxu0 %v224
    %v264 = vpop.f32.mrf.mxu0
    %v265 = vadd.f32 0.0, %v264
    %266 = vmatmul.f32.gmra.mxu0 %v225
    %v267 = vpop.f32.mrf.mxu0
    %v268 = vadd.f32 0.0, %v267
    %269 = vmatmul.f32.gmra.mxu0 %v226
    %v270 = vpop.f32.mrf.mxu0
    %v271 = vadd.f32 0.0, %v270
    %272 = vdwg.mxu0
    %v273 = vadd.f32 %v212, %v262
    %v274 = vadd.f32 %v215, %v265
    %v275 = vadd.f32 %v218, %v268
    %v276 = vadd.f32 %v221, %v271
    %v277 = vld [vmem:[#allocation8] sm:$0x1]
    %v278 = vperm.slane %v277, 0
    %v279 = vadd.f32 %v273, %v278
    %v280 = vadd.f32 %v274, %v278
    %v281 = vadd.f32 %v275, %v278
    %v282 = vadd.f32 %v276, %v278
    %v283 = vadd.f32 %v279, %v280
    %v284 = vadd.f32 %v283, %v281
    %v285 = vadd.f32 %v284, %v282
    %v286 = vrot.slane %v285, 4
    %v287 = vadd.f32 %v285, %v286
    %v288 = vrot.slane %v287, 2
    %v289 = vadd.f32 %v287, %v288
    %v290 = vrot.slane %v289, 1
    %v291 = vadd.f32 %v289, %v290
    %v292 = vmul.f32 %v279, %v279
    %v293 = vmul.f32 %v280, %v280
    %v294 = vmul.f32 %v281, %v281
    %v295 = vmul.f32 %v282, %v282
    %v296 = vadd.f32 %v292, %v293
    %v297 = vadd.f32 %v296, %v294
    %v298 = vadd.f32 %v297, %v295
    %v299 = vrot.slane %v298, 4
    %v300 = vadd.f32 %v298, %v299
    %v301 = vrot.slane %v300, 2
    %v302 = vadd.f32 %v300, %v301
    %v303 = vrot.slane %v302, 1
    %v304 = vadd.f32 %v302, %v303
    %v305 = vld [vmem:[#allocation12] sm:$0xff]
    %v306 = vld [vmem:[#allocation12 + $0x8] sm:$0xff]
    %v307 = vld [vmem:[#allocation12 + $0x10] sm:$0xff]
    %v308 = vld [vmem:[#allocation12 + $0x18] sm:$0xff]
    %v309 = vld [vmem:[#allocation12 + $0x20] sm:$0xff]
    %v310 = vld [vmem:[#allocation12 + $0x28] sm:$0xff]
    %v311 = vld [vmem:[#allocation12 + $0x30] sm:$0xff]
    %v312 = vld [vmem:[#allocation12 + $0x38] sm:$0xff]
    %v313 = vld [vmem:[#allocation12 + $0x40] sm:$0xff]
    %v314 = vld [vmem:[#allocation12 + $0x48] sm:$0xff]
    %v315 = vld [vmem:[#allocation12 + $0x50] sm:$0xff]
    %v316 = vld [vmem:[#allocation12 + $0x58] sm:$0xff]
    %v317 = vld [vmem:[#allocation12 + $0x60] sm:$0xff]
    %v318 = vld [vmem:[#allocation12 + $0x68] sm:$0xff]
    %v319 = vld [vmem:[#allocation12 + $0x70] sm:$0xff]
    %v320 = vld [vmem:[#allocation12 + $0x78] sm:$0xff]
    %321 = vmatpush.msra.mxu0 %v320
    %322 = vmatpush.msra.mxu0 %v319
    %323 = vmatpush.msra.mxu0 %v318
    %324 = vmatpush.msra.mxu0 %v317
    %325 = vmatpush.msra.mxu0 %v316
    %326 = vmatpush.msra.mxu0 %v315
    %327 = vmatpush.msra.mxu0 %v314
    %328 = vmatpush.msra.mxu0 %v313
    %329 = vmatpush.msra.mxu0 %v312
    %330 = vmatpush.msra.mxu0 %v311
    %331 = vmatpush.msra.mxu0 %v310
    %332 = vmatpush.msra.mxu0 %v309
    %333 = vmatpush.msra.mxu0 %v308
    %334 = vmatpush.msra.mxu0 %v307
    %335 = vmatpush.msra.mxu0 %v306
    %336 = vmatpush.msra.mxu0 %v305
    %337 = vmatmul.f32.gmra.mxu0 %v291
    %v338 = vpop.f32.mrf.mxu0
    %v339 = vadd.f32 0.0, %v338
    %340 = vdwg.mxu0
    %341 = vmatpush.msra.mxu0 %v320
    %342 = vmatpush.msra.mxu0 %v319
    %343 = vmatpush.msra.mxu0 %v318
    %344 = vmatpush.msra.mxu0 %v317
    %345 = vmatpush.msra.mxu0 %v316
    %346 = vmatpush.msra.mxu0 %v315
    %347 = vmatpush.msra.mxu0 %v314
    %348 = vmatpush.msra.mxu0 %v313
    %349 = vmatpush.msra.mxu0 %v312
    %350 = vmatpush.msra.mxu0 %v311
    %351 = vmatpush.msra.mxu0 %v310
    %352 = vmatpush.msra.mxu0 %v309
    %353 = vmatpush.msra.mxu0 %v308
    %354 = vmatpush.msra.mxu0 %v307
    %355 = vmatpush.msra.mxu0 %v306
    %356 = vmatpush.msra.mxu0 %v305
    %357 = vmatmul.f32.gmra.mxu0 %v304
    %v358 = vpop.f32.mrf.mxu0
    %v359 = vadd.f32 0.0, %v358
    %360 = vdwg.mxu0
    %v361 = vmul.f32 %v339, 0.001953125
    %v362 = vmul.f32 %v359, 0.001953125
    %v363 = vmul.f32 %v361, %v361
    %v364 = vsub.f32 %v362, %v363
    %v365 = vld [vmem:[#allocation9] sm:$0x1]
    %v366 = vadd.f32 %v364, 1e-05
    %v367 = vrsqrt.pop %v366
    %v368 = vmul.f32 %v367, %v366
    %v369 = vmul.f32 %v368, %v367
    %v370 = vmul.f32 0.5, %v369
    %v371 = vsub.f32 1.5, %v370
    %v372 = vmul.f32 %v367, %v371
    %vm373 = vweird.f32 %v366
    %vm374 = vweird.f32 %v367
    %vm375 = vmor %vm373, %vm374
    %v376 = vsel %vm375, %v367, %v372
    %v377 = vmul.f32 %v365, %v376
    %v378 = vld [vmem:[#allocation11] sm:$0x1]
    %v379 = vmul.f32 %v361, %v377
    %v380 = vsub.f32 %v378, %v379
    %v381 = vperm.slane %v377, 0
    %v382 = vmul.f32 %v279, %v381
    %v383 = vmul.f32 %v280, %v381
    %v384 = vmul.f32 %v281, %v381
    %v385 = vmul.f32 %v282, %v381
    %v386 = vperm.slane %v380, 0
    %v387 = vadd.f32 %v382, %v386
    %v388 = vadd.f32 %v383, %v386
    %v389 = vadd.f32 %v384, %v386
    %v390 = vadd.f32 %v385, %v386
    %v391 = vmax.f32 %v387, 0.0
    %v392 = vmax.f32 %v388, 0.0
    %v393 = vmax.f32 %v389, 0.0
    %v394 = vmax.f32 %v390, 0.0
    %395 = vst [vmem:[#allocation2 + $0x1] sm:$0xff] %v391
    %396 = vst [vmem:[#allocation2 + $0x9] sm:$0xff] %v392
    %397 = vst [vmem:[#allocation2 + $0x19] sm:$0xff] %v393
    %398 = vst [vmem:[#allocation2 + $0x21] sm:$0xff] %v394
    %v399 = vld [vmem:[#allocation2] sm:$0xff]
    %v400 = vld [vmem:[#allocation2 + $0x8] sm:$0xff]
    %v401 = vld [vmem:[#allocation2 + $0x18] sm:$0xff]
    %v402 = vld [vmem:[#allocation2 + $0x20] sm:$0xff]
    %s403 = scalar_lea.vmem [#allocation6], 384
    %v404 = vld [vmem:[%s403] sm:$0xff]
    %v405 = vld [vmem:[%s403 + $0x8] sm:$0xff]
    %v406 = vld [vmem:[%s403 + $0x10] sm:$0xff]
    %v407 = vld [vmem:[%s403 + $0x18] sm:$0xff]
    %v408 = vld [vmem:[%s403 + $0x20] sm:$0xff]
    %v409 = vld [vmem:[%s403 + $0x28] sm:$0xff]
    %v410 = vld [vmem:[%s403 + $0x30] sm:$0xff]
    %v411 = vld [vmem:[%s403 + $0x38] sm:$0xff]
    %v412 = vld [vmem:[%s403 + $0x40] sm:$0xff]
    %v413 = vld [vmem:[%s403 + $0x48] sm:$0xff]
    %v414 = vld [vmem:[%s403 + $0x50] sm:$0xff]
    %v415 = vld [vmem:[%s403 + $0x58] sm:$0xff]
    %v416 = vld [vmem:[%s403 + $0x60] sm:$0xff]
    %v417 = vld [vmem:[%s403 + $0x68] sm:$0xff]
    %v418 = vld [vmem:[%s403 + $0x70] sm:$0xff]
    %v419 = vld [vmem:[%s403 + $0x78] sm:$0xff]
    %v420 = vld [vmem:[#allocation2 + $0x1] sm:$0xff]
    %v421 = vld [vmem:[#allocation2 + $0x9] sm:$0xff]
    %v422 = vld [vmem:[#allocation2 + $0x19] sm:$0xff]
    %v423 = vld [vmem:[#allocation2 + $0x21] sm:$0xff]
    %s424 = scalar_lea.vmem [#allocation6], 512
    %v425 = vld [vmem:[%s424] sm:$0xff]
    %v426 = vld [vmem:[%s424 + $0x8] sm:$0xff]
    %v427 = vld [vmem:[%s424 + $0x10] sm:$0xff]
    %v428 = vld [vmem:[%s424 + $0x18] sm:$0xff]
    %v429 = vld [vmem:[%s424 + $0x20] sm:$0xff]
    %v430 = vld [vmem:[%s424 + $0x28] sm:$0xff]
    %v431 = vld [vmem:[%s424 + $0x30] sm:$0xff]
    %v432 = vld [vmem:[%s424 + $0x38] sm:$0xff]
    %v433 = vld [vmem:[%s424 + $0x40] sm:$0xff]
    %v434 = vld [vmem:[%s424 + $0x48] sm:$0xff]
    %v435 = vld [vmem:[%s424 + $0x50] sm:$0xff]
    %v436 = vld [vmem:[%s424 + $0x58] sm:$0xff]
    %v437 = vld [vmem:[%s424 + $0x60] sm:$0xff]
    %v438 = vld [vmem:[%s424 + $0x68] sm:$0xff]
    %v439 = vld [vmem:[%s424 + $0x70] sm:$0xff]
    %v440 = vld [vmem:[%s424 + $0x78] sm:$0xff]
    %441 = vmatpush.msra.mxu0 %v440
    %442 = vmatpush.msra.mxu0 %v439
    %443 = vmatpush.msra.mxu0 %v438
    %444 = vmatpush.msra.mxu0 %v437
    %445 = vmatpush.msra.mxu0 %v436
    %446 = vmatpush.msra.mxu0 %v435
    %447 = vmatpush.msra.mxu0 %v434
    %448 = vmatpush.msra.mxu0 %v433
    %449 = vmatpush.msra.mxu0 %v432
    %450 = vmatpush.msra.mxu0 %v431
    %451 = vmatpush.msra.mxu0 %v430
    %452 = vmatpush.msra.mxu0 %v429
    %453 = vmatpush.msra.mxu0 %v428
    %454 = vmatpush.msra.mxu0 %v427
    %455 = vmatpush.msra.mxu0 %v426
    %456 = vmatpush.msra.mxu0 %v425
    %457 = vmatmul.f32.gmra.mxu0 %v420
    %v458 = vpop.f32.mrf.mxu0
    %v459 = vadd.f32 0.0, %v458
    %460 = vmatmul.f32.gmra.mxu0 %v421
    %v461 = vpop.f32.mrf.mxu0
    %v462 = vadd.f32 0.0, %v461
    %463 = vmatmul.f32.gmra.mxu0 %v422
    %v464 = vpop.f32.mrf.mxu0
    %v465 = vadd.f32 0.0, %v464
    %466 = vmatmul.f32.gmra.mxu0 %v423
    %v467 = vpop.f32.mrf.mxu0
    %v468 = vadd.f32 0.0, %v467
    %469 = vdwg.mxu0
    %470 = vmatpush.msra.mxu0 %v419
    %471 = vmatpush.msra.mxu0 %v418
    %472 = vmatpush.msra.mxu0 %v417
    %473 = vmatpush.msra.mxu0 %v416
    %474 = vmatpush.msra.mxu0 %v415
    %475 = vmatpush.msra.mxu0 %v414
    %476 = vmatpush.msra.mxu0 %v413
    %477 = vmatpush.msra.mxu0 %v412
    %478 = vmatpush.msra.mxu0 %v411
    %479 = vmatpush.msra.mxu0 %v410
    %480 = vmatpush.msra.mxu0 %v409
    %481 = vmatpush.msra.mxu0 %v408
    %482 = vmatpush.msra.mxu0 %v407
    %483 = vmatpush.msra.mxu0 %v406
    %484 = vmatpush.msra.mxu0 %v405
    %485 = vmatpush.msra.mxu0 %v404
    %486 = vmatmul.f32.gmra.mxu0 %v399
    %v487 = vpop.f32.mrf.mxu0
    %v488 = vadd.f32 %v459, %v487
    %489 = vmatmul.f32.gmra.mxu0 %v400
    %v490 = vpop.f32.mrf.mxu0
    %v491 = vadd.f32 %v462, %v490
    %492 = vmatmul.f32.gmra.mxu0 %v401
    %v493 = vpop.f32.mrf.mxu0
    %v494 = vadd.f32 %v465, %v493
    %495 = vmatmul.f32.gmra.mxu0 %v402
    %v496 = vpop.f32.mrf.mxu0
    %v497 = vadd.f32 %v468, %v496
    %498 = vdwg.mxu0
    %v499 = vld [vmem:[#allocation2 + $0x2] sm:$0xff]
    %v500 = vld [vmem:[#allocation2 + $0xa] sm:$0xff]
    %v501 = vld [vmem:[#allocation2 + $0x1a] sm:$0xff]
    %v502 = vld [vmem:[#allocation2 + $0x22] sm:$0xff]
    %s503 = scalar_lea.vmem [#allocation6], 640
    %v504 = vld [vmem:[%s503] sm:$0xff]
    %v505 = vld [vmem:[%s503 + $0x8] sm:$0xff]
    %v506 = vld [vmem:[%s503 + $0x10] sm:$0xff]
    %v507 = vld [vmem:[%s503 + $0x18] sm:$0xff]
    %v508 = vld [vmem:[%s503 + $0x20] sm:$0xff]
    %v509 = vld [vmem:[%s503 + $0x28] sm:$0xff]
    %v510 = vld [vmem:[%s503 + $0x30] sm:$0xff]
    %v511 = vld [vmem:[%s503 + $0x38] sm:$0xff]
    %v512 = vld [vmem:[%s503 + $0x40] sm:$0xff]
    %v513 = vld [vmem:[%s503 + $0x48] sm:$0xff]
    %v514 = vld [vmem:[%s503 + $0x50] sm:$0xff]
    %v515 = vld [vmem:[%s503 + $0x58] sm:$0xff]
    %v516 = vld [vmem:[%s503 + $0x60] sm:$0xff]
    %v517 = vld [vmem:[%s503 + $0x68] sm:$0xff]
    %v518 = vld [vmem:[%s503 + $0x70] sm:$0xff]
    %v519 = vld [vmem:[%s503 + $0x78] sm:$0xff]
    %520 = vmatpush.msra.mxu0 %v519
    %521 = vmatpush.msra.mxu0 %v518
    %522 = vmatpush.msra.mxu0 %v517
    %523 = vmatpush.msra.mxu0 %v516
    %524 = vmatpush.msra.mxu0 %v515
    %525 = vmatpush.msra.mxu0 %v514
    %526 = vmatpush.msra.mxu0 %v513
    %527 = vmatpush.msra.mxu0 %v512
    %528 = vmatpush.msra.mxu0 %v511
    %529 = vmatpush.msra.mxu0 %v510
    %530 = vmatpush.msra.mxu0 %v509
    %531 = vmatpush.msra.mxu0 %v508
    %532 = vmatpush.msra.mxu0 %v507
    %533 = vmatpush.msra.mxu0 %v506
    %534 = vmatpush.msra.mxu0 %v505
    %535 = vmatpush.msra.mxu0 %v504
    %536 = vmatmul.f32.gmra.mxu0 %v499
    %v537 = vpop.f32.mrf.mxu0
    %v538 = vadd.f32 0.0, %v537
    %539 = vmatmul.f32.gmra.mxu0 %v500
    %v540 = vpop.f32.mrf.mxu0
    %v541 = vadd.f32 0.0, %v540
    %542 = vmatmul.f32.gmra.mxu0 %v501
    %v543 = vpop.f32.mrf.mxu0
    %v544 = vadd.f32 0.0, %v543
    %545 = vmatmul.f32.gmra.mxu0 %v502
    %v546 = vpop.f32.mrf.mxu0
    %v547 = vadd.f32 0.0, %v546
    %548 = vdwg.mxu0
    %v549 = vadd.f32 %v488, %v538
    %v550 = vadd.f32 %v491, %v541
    %v551 = vadd.f32 %v494, %v544
    %v552 = vadd.f32 %v497, %v547
    %v553 = vld [vmem:[#allocation8 + $0x1] sm:$0x1]
    %v554 = vperm.slane %v553, 0
    %v555 = vadd.f32 %v549, %v554
    %v556 = vadd.f32 %v550, %v554
    %v557 = vadd.f32 %v551, %v554
    %v558 = vadd.f32 %v552, %v554
    %v559 = vadd.f32 %v555, %v116
    %v560 = vadd.f32 %v556, %v117
    %v561 = vadd.f32 %v557, %v118
    %v562 = vadd.f32 %v558, %v119
    %v563 = vadd.f32 %v559, %v560
    %v564 = vadd.f32 %v563, %v561
    %v565 = vadd.f32 %v564, %v562
    %v566 = vrot.slane %v565, 4
    %v567 = vadd.f32 %v565, %v566
    %v568 = vrot.slane %v567, 2
    %v569 = vadd.f32 %v567, %v568
    %v570 = vrot.slane %v569, 1
    %v571 = vadd.f32 %v569, %v570
    %v572 = vmul.f32 %v559, %v559
    %v573 = vmul.f32 %v560, %v560
    %v574 = vmul.f32 %v561, %v561
    %v575 = vmul.f32 %v562, %v562
    %v576 = vadd.f32 %v572, %v573
    %v577 = vadd.f32 %v576, %v574
    %v578 = vadd.f32 %v577, %v575
    %v579 = vrot.slane %v578, 4
    %v580 = vadd.f32 %v578, %v579
    %v581 = vrot.slane %v580, 2
    %v582 = vadd.f32 %v580, %v581
    %v583 = vrot.slane %v582, 1
    %v584 = vadd.f32 %v582, %v583
    %v585 = vld [vmem:[#allocation12] sm:$0xff]
    %v586 = vld [vmem:[#allocation12 + $0x8] sm:$0xff]
    %v587 = vld [vmem:[#allocation12 + $0x10] sm:$0xff]
    %v588 = vld [vmem:[#allocation12 + $0x18] sm:$0xff]
    %v589 = vld [vmem:[#allocation12 + $0x20] sm:$0xff]
    %v590 = vld [vmem:[#allocation12 + $0x28] sm:$0xff]
    %v591 = vld [vmem:[#allocation12 + $0x30] sm:$0xff]
    %v592 = vld [vmem:[#allocation12 + $0x38] sm:$0xff]
    %v593 = vld [vmem:[#allocation12 + $0x40] sm:$0xff]
    %v594 = vld [vmem:[#allocation12 + $0x48] sm:$0xff]
    %v595 = vld [vmem:[#allocation12 + $0x50] sm:$0xff]
    %v596 = vld [vmem:[#allocation12 + $0x58] sm:$0xff]
    %v597 = vld [vmem:[#allocation12 + $0x60] sm:$0xff]
    %v598 = vld [vmem:[#allocation12 + $0x68] sm:$0xff]
    %v599 = vld [vmem:[#allocation12 + $0x70] sm:$0xff]
    %v600 = vld [vmem:[#allocation12 + $0x78] sm:$0xff]
    %601 = vmatpush.msra.mxu0 %v600
    %602 = vmatpush.msra.mxu0 %v599
    %603 = vmatpush.msra.mxu0 %v598
    %604 = vmatpush.msra.mxu0 %v597
    %605 = vmatpush.msra.mxu0 %v596
    %606 = vmatpush.msra.mxu0 %v595
    %607 = vmatpush.msra.mxu0 %v594
    %608 = vmatpush.msra.mxu0 %v593
    %609 = vmatpush.msra.mxu0 %v592
    %610 = vmatpush.msra.mxu0 %v591
    %611 = vmatpush.msra.mxu0 %v590
    %612 = vmatpush.msra.mxu0 %v589
    %613 = vmatpush.msra.mxu0 %v588
    %614 = vmatpush.msra.mxu0 %v587
    %615 = vmatpush.msra.mxu0 %v586
    %616 = vmatpush.msra.mxu0 %v585
    %617 = vmatmul.f32.gmra.mxu0 %v571
    %v618 = vpop.f32.mrf.mxu0
    %v619 = vadd.f32 0.0, %v618
    %620 = vdwg.mxu0
    %621 = vmatpush.msra.mxu0 %v600
    %622 = vmatpush.msra.mxu0 %v599
    %623 = vmatpush.msra.mxu0 %v598
    %624 = vmatpush.msra.mxu0 %v597
    %625 = vmatpush.msra.mxu0 %v596
    %626 = vmatpush.msra.mxu0 %v595
    %627 = vmatpush.msra.mxu0 %v594
    %628 = vmatpush.msra.mxu0 %v593
    %629 = vmatpush.msra.mxu0 %v592
    %630 = vmatpush.msra.mxu0 %v591
    %631 = vmatpush.msra.mxu0 %v590
    %632 = vmatpush.msra.mxu0 %v589
    %633 = vmatpush.msra.mxu0 %v588
    %634 = vmatpush.msra.mxu0 %v587
    %635 = vmatpush.msra.mxu0 %v586
    %636 = vmatpush.msra.mxu0 %v585
    %637 = vmatmul.f32.gmra.mxu0 %v584
    %v638 = vpop.f32.mrf.mxu0
    %v639 = vadd.f32 0.0, %v638
    %640 = vdwg.mxu0
    %v641 = vmul.f32 %v619, 0.001953125
    %v642 = vmul.f32 %v639, 0.001953125
    %v643 = vmul.f32 %v641, %v641
    %v644 = vsub.f32 %v642, %v643
    %v645 = vld [vmem:[#allocation9 + $0x1] sm:$0x1]
    %v646 = vadd.f32 %v644, 1e-05
    %v647 = vrsqrt.pop %v646
    %v648 = vmul.f32 %v647, %v646
    %v649 = vmul.f32 %v648, %v647
    %v650 = vmul.f32 0.5, %v649
    %v651 = vsub.f32 1.5, %v650
    %v652 = vmul.f32 %v647, %v651
    %vm653 = vweird.f32 %v646
    %vm654 = vweird.f32 %v647
    %vm655 = vmor %vm653, %vm654
    %v656 = vsel %vm655, %v647, %v652
    %v657 = vmul.f32 %v645, %v656
    %v658 = vld [vmem:[#allocation11 + $0x1] sm:$0x1]
    %v659 = vmul.f32 %v641, %v657
    %v660 = vsub.f32 %v658, %v659
    %v661 = vperm.slane %v657, 0
    %v662 = vmul.f32 %v559, %v661
    %v663 = vmul.f32 %v560, %v661
    %v664 = vmul.f32 %v561, %v661
    %v665 = vmul.f32 %v562, %v661
    %v666 = vperm.slane %v660, 0
    %v667 = vadd.f32 %v662, %v666
    %v668 = vadd.f32 %v663, %v666
    %v669 = vadd.f32 %v664, %v666
    %v670 = vadd.f32 %v665, %v666
    %v671 = vmax.f32 %v667, 0.0
    %v672 = vmax.f32 %v668, 0.0
    %v673 = vmax.f32 %v669, 0.0
    %v674 = vmax.f32 %v670, 0.0
    %v675 = vadd.f32 %v116, %v391
    %v676 = vadd.f32 %v117, %v392
    %v677 = vadd.f32 %v118, %v393
    %v678 = vadd.f32 %v119, %v394
    %679 = vst [vmem:[#allocation2 + $0x1] sm:$0xff] %v671
    %680 = vst [vmem:[#allocation2 + $0x9] sm:$0xff] %v672
    %681 = vst [vmem:[#allocation2 + $0x19] sm:$0xff] %v673
    %682 = vst [vmem:[#allocation2 + $0x21] sm:$0xff] %v674
    %v683 = vld [vmem:[#allocation2] sm:$0xff]
    %v684 = vld [vmem:[#allocation2 + $0x8] sm:$0xff]
    %v685 = vld [vmem:[#allocation2 + $0x18] sm:$0xff]
    %v686 = vld [vmem:[#allocation2 + $0x20] sm:$0xff]
    %s687 = scalar_lea.vmem [#allocation6], 768
    %v688 = vld [vmem:[%s687] sm:$0xff]
    %v689 = vld [vmem:[%s687 + $0x8] sm:$0xff]
    %v690 = vld [vmem:[%s687 + $0x10] sm:$0xff]
    %v691 = vld [vmem:[%s687 + $0x18] sm:$0xff]
    %v692 = vld [vmem:[%s687 + $0x20] sm:$0xff]
    %v693 = vld [vmem:[%s687 + $0x28] sm:$0xff]
    %v694 = vld [vmem:[%s687 + $0x30] sm:$0xff]
    %v695 = vld [vmem:[%s687 + $0x38] sm:$0xff]
    %v696 = vld [vmem:[%s687 + $0x40] sm:$0xff]
    %v697 = vld [vmem:[%s687 + $0x48] sm:$0xff]
    %v698 = vld [vmem:[%s687 + $0x50] sm:$0xff]
    %v699 = vld [vmem:[%s687 + $0x58] sm:$0xff]
    %v700 = vld [vmem:[%s687 + $0x60] sm:$0xff]
    %v701 = vld [vmem:[%s687 + $0x68] sm:$0xff]
    %v702 = vld [vmem:[%s687 + $0x70] sm:$0xff]
    %v703 = vld [vmem:[%s687 + $0x78] sm:$0xff]
    %v704 = vld [vmem:[#allocation2 + $0x1] sm:$0xff]
    %v705 = vld [vmem:[#allocation2 + $0x9] sm:$0xff]
    %v706 = vld [vmem:[#allocation2 + $0x19] sm:$0xff]
    %v707 = vld [vmem:[#allocation2 + $0x21] sm:$0xff]
    %s708 = scalar_lea.vmem [#allocation6], 896
    %v709 = vld [vmem:[%s708] sm:$0xff]
    %v710 = vld [vmem:[%s708 + $0x8] sm:$0xff]
    %v711 = vld [vmem:[%s708 + $0x10] sm:$0xff]
    %v712 = vld [vmem:[%s708 + $0x18] sm:$0xff]
    %v713 = vld [vmem:[%s708 + $0x20] sm:$0xff]
    %v714 = vld [vmem:[%s708 + $0x28] sm:$0xff]
    %v715 = vld [vmem:[%s708 + $0x30] sm:$0xff]
    %v716 = vld [vmem:[%s708 + $0x38] sm:$0xff]
    %v717 = vld [vmem:[%s708 + $0x40] sm:$0xff]
    %v718 = vld [vmem:[%s708 + $0x48] sm:$0xff]
    %v719 = vld [vmem:[%s708 + $0x50] sm:$0xff]
    %v720 = vld [vmem:[%s708 + $0x58] sm:$0xff]
    %v721 = vld [vmem:[%s708 + $0x60] sm:$0xff]
    %v722 = vld [vmem:[%s708 + $0x68] sm:$0xff]
    %v723 = vld [vmem:[%s708 + $0x70] sm:$0xff]
    %v724 = vld [vmem:[%s708 + $0x78] sm:$0xff]
    %725 = vmatpush.msra.mxu0 %v724
    %726 = vmatpush.msra.mxu0 %v723
    %727 = vmatpush.msra.mxu0 %v722
    %728 = vmatpush.msra.mxu0 %v721
    %729 = vmatpush.msra.mxu0 %v720
    %730 = vmatpush.msra.mxu0 %v719
    %731 = vmatpush.msra.mxu0 %v718
    %732 = vmatpush.msra.mxu0 %v717
    %733 = vmatpush.msra.mxu0 %v716
    %734 = vmatpush.msra.mxu0 %v715
    %735 = vmatpush.msra.mxu0 %v714
    %736 = vmatpush.msra.mxu0 %v713
    %737 = vmatpush.msra.mxu0 %v712
    %738 = vmatpush.msra.mxu0 %v711
    %739 = vmatpush.msra.mxu0 %v710
    %740 = vmatpush.msra.mxu0 %v709
    %741 = vmatmul.f32.gmra.mxu0 %v704
    %v742 = vpop.f32.mrf.mxu0
    %v743 = vadd.f32 0.0, %v742
    %744 = vmatmul.f32.gmra.mxu0 %v705
    %v745 = vpop.f32.mrf.mxu0
    %v746 = vadd.f32 0.0, %v745
    %747 = vmatmul.f32.gmra.mxu0 %v706
    %v748 = vpop.f32.mrf.mxu0
    %v749 = vadd.f32 0.0, %v748
    %750 = vmatmul.f32.gmra.mxu0 %v707
    %v751 = vpop.f32.mrf.mxu0
    %v752 = vadd.f32 0.0, %v751
    %753 = vdwg.mxu0
    %754 = vmatpush.msra.mxu0 %v703
    %755 = vmatpush.msra.mxu0 %v702
    %756 = vmatpush.msra.mxu0 %v701
    %757 = vmatpush.msra.mxu0 %v700
    %758 = vmatpush.msra.mxu0 %v699
    %759 = vmatpush.msra.mxu0 %v698
    %760 = vmatpush.msra.mxu0 %v697
    %761 = vmatpush.msra.mxu0 %v696
    %762 = vmatpush.msra.mxu0 %v695
    %763 = vmatpush.msra.mxu0 %v694
    %764 = vmatpush.msra.mxu0 %v693
    %765 = vmatpush.msra.mxu0 %v692
    %766 = vmatpush.msra.mxu0 %v691
    %767 = vmatpush.msra.mxu0 %v690
    %768 = vmatpush.msra.mxu0 %v689
    %769 = vmatpush.msra.mxu0 %v688
    %770 = vmatmul.f32.gmra.mxu0 %v683
    %v771 = vpop.f32.mrf.mxu0
    %v772 = vadd.f32 %v743, %v771
    %773 = vmatmul.f32.gmra.mxu0 %v684
    %v774 = vpop.f32.mrf.mxu0
    %v775 = vadd.f32 %v746, %v774
    %776 = vmatmul.f32.gmra.mxu0 %v685
    %v777 = vpop.f32.mrf.mxu0
    %v778 = vadd.f32 %v749, %v777
    %779 = vmatmul.f32.gmra.mxu0 %v686
    %v780 = vpop.f32.mrf.mxu0
    %v781 = vadd.f32 %v752, %v780
    %782 = vdwg.mxu0
    %v783 = vld [vmem:[#allocation2 + $0x2] sm:$0xff]
    %v784 = vld [vmem:[#allocation2 + $0xa] sm:$0xff]
    %v785 = vld [vmem:[#allocation2 + $0x1a] sm:$0xff]
    %v786 = vld [vmem:[#allocation2 + $0x22] sm:$0xff]
    %s787 = scalar_lea.vmem [#allocation6], 1024
    %v788 = vld [vmem:[%s787] sm:$0xff]
    %v789 = vld [vmem:[%s787 + $0x8] sm:$0xff]
    %v790 = vld [vmem:[%s787 + $0x10] sm:$0xff]
    %v791 = vld [vmem:[%s787 + $0x18] sm:$0xff]
    %v792 = vld [vmem:[%s787 + $0x20] sm:$0xff]
    %v793 = vld [vmem:[%s787 + $0x28] sm:$0xff]
    %v794 = vld [vmem:[%s787 + $0x30] sm:$0xff]
    %v795 = vld [vmem:[%s787 + $0x38] sm:$0xff]
    %v796 = vld [vmem:[%s787 + $0x40] sm:$0xff]
    %v797 = vld [vmem:[%s787 + $0x48] sm:$0xff]
    %v798 = vld [vmem:[%s787 + $0x50] sm:$0xff]
    %v799 = vld [vmem:[%s787 + $0x58] sm:$0xff]
    %v800 = vld [vmem:[%s787 + $0x60] sm:$0xff]
    %v801 = vld [vmem:[%s787 + $0x68] sm:$0xff]
    %v802 = vld [vmem:[%s787 + $0x70] sm:$0xff]
    %v803 = vld [vmem:[%s787 + $0x78] sm:$0xff]
    %804 = vmatpush.msra.mxu0 %v803
    %805 = vmatpush.msra.mxu0 %v802
    %806 = vmatpush.msra.mxu0 %v801
    %807 = vmatpush.msra.mxu0 %v800
    %808 = vmatpush.msra.mxu0 %v799
    %809 = vmatpush.msra.mxu0 %v798
    %810 = vmatpush.msra.mxu0 %v797
    %811 = vmatpush.msra.mxu0 %v796
    %812 = vmatpush.msra.mxu0 %v795
    %813 = vmatpush.msra.mxu0 %v794
    %814 = vmatpush.msra.mxu0 %v793
    %815 = vmatpush.msra.mxu0 %v792
    %816 = vmatpush.msra.mxu0 %v791
    %817 = vmatpush.msra.mxu0 %v790
    %818 = vmatpush.msra.mxu0 %v789
    %819 = vmatpush.msra.mxu0 %v788
    %820 = vmatmul.f32.gmra.mxu0 %v783
    %v821 = vpop.f32.mrf.mxu0
    %v822 = vadd.f32 0.0, %v821
    %823 = vmatmul.f32.gmra.mxu0 %v784
    %v824 = vpop.f32.mrf.mxu0
    %v825 = vadd.f32 0.0, %v824
    %826 = vmatmul.f32.gmra.mxu0 %v785
    %v827 = vpop.f32.mrf.mxu0
    %v828 = vadd.f32 0.0, %v827
    %829 = vmatmul.f32.gmra.mxu0 %v786
    %v830 = vpop.f32.mrf.mxu0
    %v831 = vadd.f32 0.0, %v830
    %832 = vdwg.mxu0
    %v833 = vadd.f32 %v772, %v822
    %v834 = vadd.f32 %v775, %v825
    %v835 = vadd.f32 %v778, %v828
    %v836 = vadd.f32 %v781, %v831
    %v837 = vld [vmem:[#allocation8 + $0x2] sm:$0x1]
    %v838 = vperm.slane %v837, 0
    %v839 = vadd.f32 %v833, %v838
    %v840 = vadd.f32 %v834, %v838
    %v841 = vadd.f32 %v835, %v838
    %v842 = vadd.f32 %v836, %v838
    %v843 = vadd.f32 %v839, %v675
    %v844 = vadd.f32 %v840, %v676
    %v845 = vadd.f32 %v841, %v677
    %v846 = vadd.f32 %v842, %v678
    %v847 = vadd.f32 %v843, %v844
    %v848 = vadd.f32 %v847, %v845
    %v849 = vadd.f32 %v848, %v846
    %v850 = vrot.slane %v849, 4
    %v851 = vadd.f32 %v849, %v850
    %v852 = vrot.slane %v851, 2
    %v853 = vadd.f32 %v851, %v852
    %v854 = vrot.slane %v853, 1
    %v855 = vadd.f32 %v853, %v854
    %v856 = vmul.f32 %v843, %v843
    %v857 = vmul.f32 %v844, %v844
    %v858 = vmul.f32 %v845, %v845
    %v859 = vmul.f32 %v846, %v846
    %v860 = vadd.f32 %v856, %v857
    %v861 = vadd.f32 %v860, %v858
    %v862 = vadd.f32 %v861, %v859
    %v863 = vrot.slane %v862, 4
    %v864 = vadd.f32 %v862, %v863
    %v865 = vrot.slane %v864, 2
    %v866 = vadd.f32 %v864, %v865
    %v867 = vrot.slane %v866, 1
    %v868 = vadd.f32 %v866, %v867
    %v869 = vld [vmem:[#allocation12] sm:$0xff]
    %v870 = vld [vmem:[#allocation12 + $0x8] sm:$0xff]
    %v871 = vld [vmem:[#allocation12 + $0x10] sm:$0xff]
    %v872 = vld [vmem:[#allocation12 + $0x18] sm:$0xff]
    %v873 = vld [vmem:[#allocation12 + $0x20] sm:$0xff]
    %v874 = vld [vmem:[#allocation12 + $0x28] sm:$0xff]
    %v875 = vld [vmem:[#allocation12 + $0x30] sm:$0xff]
    %v876 = vld [vmem:[#allocation12 + $0x38] sm:$0xff]
    %v877 = vld [vmem:[#allocation12 + $0x40] sm:$0xff]
    %v878 = vld [vmem:[#allocation12 + $0x48] sm:$0xff]
    %v879 = vld [vmem:[#allocation12 + $0x50] sm:$0xff]
    %v880 = vld [vmem:[#allocation12 + $0x58] sm:$0xff]
    %v881 = vld [vmem:[#allocation12 + $0x60] sm:$0xff]
    %v882 = vld [vmem:[#allocation12 + $0x68] sm:$0xff]
    %v883 = vld [vmem:[#allocation12 + $0x70] sm:$0xff]
    %v884 = vld [vmem:[#allocation12 + $0x78] sm:$0xff]
    %885 = vmatpush.msra.mxu0 %v884
    %886 = vmatpush.msra.mxu0 %v883
    %887 = vmatpush.msra.mxu0 %v882
    %888 = vmatpush.msra.mxu0 %v881
    %889 = vmatpush.msra.mxu0 %v880
    %890 = vmatpush.msra.mxu0 %v879
    %891 = vmatpush.msra.mxu0 %v878
    %892 = vmatpush.msra.mxu0 %v877
    %893 = vmatpush.msra.mxu0 %v876
    %894 = vmatpush.msra.mxu0 %v875
    %895 = vmatpush.msra.mxu0 %v874
    %896 = vmatpush.msra.mxu0 %v873
    %897 = vmatpush.msra.mxu0 %v872
    %898 = vmatpush.msra.mxu0 %v871
    %899 = vmatpush.msra.mxu0 %v870
    %900 = vmatpush.msra.mxu0 %v869
    %901 = vmatmul.f32.gmra.mxu0 %v855
    %v902 = vpop.f32.mrf.mxu0
    %v903 = vadd.f32 0.0, %v902
    %904 = vdwg.mxu0
    %905 = vmatpush.msra.mxu0 %v884
    %906 = vmatpush.msra.mxu0 %v883
    %907 = vmatpush.msra.mxu0 %v882
    %908 = vmatpush.msra.mxu0 %v881
    %909 = vmatpush.msra.mxu0 %v880
    %910 = vmatpush.msra.mxu0 %v879
    %911 = vmatpush.msra.mxu0 %v878
    %912 = vmatpush.msra.mxu0 %v877
    %913 = vmatpush.msra.mxu0 %v876
    %914 = vmatpush.msra.mxu0 %v875
    %915 = vmatpush.msra.mxu0 %v874
    %916 = vmatpush.msra.mxu0 %v873
    %917 = vmatpush.msra.mxu0 %v872
    %918 = vmatpush.msra.mxu0 %v871
    %919 = vmatpush.msra.mxu0 %v870
    %920 = vmatpush.msra.mxu0 %v869
    %921 = vmatmul.f32.gmra.mxu0 %v868
    %v922 = vpop.f32.mrf.mxu0
    %v923 = vadd.f32 0.0, %v922
    %924 = vdwg.mxu0
    %v925 = vmul.f32 %v903, 0.001953125
    %v926 = vmul.f32 %v923, 0.001953125
    %v927 = vmul.f32 %v925, %v925
    %v928 = vsub.f32 %v926, %v927
    %v929 = vld [vmem:[#allocation9 + $0x2] sm:$0x1]
    %v930 = vadd.f32 %v928, 1e-05
    %v931 = vrsqrt.pop %v930
    %v932 = vmul.f32 %v931, %v930
    %v933 = vmul.f32 %v932, %v931
    %v934 = vmul.f32 0.5, %v933
    %v935 = vsub.f32 1.5, %v934
    %v936 = vmul.f32 %v931, %v935
    %vm937 = vweird.f32 %v930
    %vm938 = vweird.f32 %v931
    %vm939 = vmor %vm937, %vm938
    %v940 = vsel %vm939, %v931, %v936
    %v941 = vmul.f32 %v929, %v940
    %v942 = vld [vmem:[#allocation11 + $0x2] sm:$0x1]
    %v943 = vmul.f32 %v925, %v941
    %v944 = vsub.f32 %v942, %v943
    %v945 = vperm.slane %v941, 0
    %v946 = vmul.f32 %v843, %v945
    %v947 = vmul.f32 %v844, %v945
    %v948 = vmul.f32 %v845, %v945
    %v949 = vmul.f32 %v846, %v945
    %v950 = vperm.slane %v944, 0
    %v951 = vadd.f32 %v946, %v950
    %v952 = vadd.f32 %v947, %v950
    %v953 = vadd.f32 %v948, %v950
    %v954 = vadd.f32 %v949, %v950
    %v955 = vmax.f32 %v951, 0.0
    %v956 = vmax.f32 %v952, 0.0
    %v957 = vmax.f32 %v953, 0.0
    %v958 = vmax.f32 %v954, 0.0
    %v959 = vadd.f32 %v675, %v671
    %v960 = vadd.f32 %v676, %v672
    %v961 = vadd.f32 %v677, %v673
    %v962 = vadd.f32 %v678, %v674
    %963 = vst [vmem:[#allocation2 + $0x1] sm:$0xff] %v955
    %964 = vst [vmem:[#allocation2 + $0x9] sm:$0xff] %v956
    %965 = vst [vmem:[#allocation2 + $0x19] sm:$0xff] %v957
    %966 = vst [vmem:[#allocation2 + $0x21] sm:$0xff] %v958
    %v967 = vld [vmem:[#allocation2] sm:$0xff]
    %v968 = vld [vmem:[#allocation2 + $0x8] sm:$0xff]
    %v969 = vld [vmem:[#allocation2 + $0x18] sm:$0xff]
    %v970 = vld [vmem:[#allocation2 + $0x20] sm:$0xff]
    %s971 = scalar_lea.vmem [#allocation6], 1152
    %v972 = vld [vmem:[%s971] sm:$0xff]
    %v973 = vld [vmem:[%s971 + $0x8] sm:$0xff]
    %v974 = vld [vmem:[%s971 + $0x10] sm:$0xff]
    %v975 = vld [vmem:[%s971 + $0x18] sm:$0xff]
    %v976 = vld [vmem:[%s971 + $0x20] sm:$0xff]
    %v977 = vld [vmem:[%s971 + $0x28] sm:$0xff]
    %v978 = vld [vmem:[%s971 + $0x30] sm:$0xff]
    %v979 = vld [vmem:[%s971 + $0x38] sm:$0xff]
    %v980 = vld [vmem:[%s971 + $0x40] sm:$0xff]
    %v981 = vld [vmem:[%s971 + $0x48] sm:$0xff]
    %v982 = vld [vmem:[%s971 + $0x50] sm:$0xff]
    %v983 = vld [vmem:[%s971 + $0x58] sm:$0xff]
    %v984 = vld [vmem:[%s971 + $0x60] sm:$0xff]
    %v985 = vld [vmem:[%s971 + $0x68] sm:$0xff]
    %v986 = vld [vmem:[%s971 + $0x70] sm:$0xff]
    %v987 = vld [vmem:[%s971 + $0x78] sm:$0xff]
    %v988 = vld [vmem:[#allocation2 + $0x1] sm:$0xff]
    %v989 = vld [vmem:[#allocation2 + $0x9] sm:$0xff]
    %v990 = vld [vmem:[#allocation2 + $0x19] sm:$0xff]
    %v991 = vld [vmem:[#allocation2 + $0x21] sm:$0xff]
    %s992 = scalar_lea.vmem [#allocation6], 1280
    %v993 = vld [vmem:[%s992] sm:$0xff]
    %v994 = vld [vmem:[%s992 + $0x8] sm:$0xff]
    %v995 = vld [vmem:[%s992 + $0x10] sm:$0xff]
    %v996 = vld [vmem:[%s992 + $0x18] sm:$0xff]
    %v997 = vld [vmem:[%s992 + $0x20] sm:$0xff]
    %v998 = vld [vmem:[%s992 + $0x28] sm:$0xff]
    %v999 = vld [vmem:[%s992 + $0x30] sm:$0xff]
    %v1000 = vld [vmem:[%s992 + $0x38] sm:$0xff]
    %v1001 = vld [vmem:[%s992 + $0x40] sm:$0xff]
    %v1002 = vld [vmem:[%s992 + $0x48] sm:$0xff]
    %v1003 = vld [vmem:[%s992 + $0x50] sm:$0xff]
    %v1004 = vld [vmem:[%s992 + $0x58] sm:$0xff]
    %v1005 = vld [vmem:[%s992 + $0x60] sm:$0xff]
    %v1006 = vld [vmem:[%s992 + $0x68] sm:$0xff]
    %v1007 = vld [vmem:[%s992 + $0x70] sm:$0xff]
    %v1008 = vld [vmem:[%s992 + $0x78] sm:$0xff]
    %1009 = vmatpush.msra.mxu0 %v1008
    %1010 = vmatpush.msra.mxu0 %v1007
    %1011 = vmatpush.msra.mxu0 %v1006
    %1012 = vmatpush.msra.mxu0 %v1005
    %1013 = vmatpush.msra.mxu0 %v1004
    %1014 = vmatpush.msra.mxu0 %v1003
    %1015 = vmatpush.msra.mxu0 %v1002
    %1016 = vmatpush.msra.mxu0 %v1001
    %1017 = vmatpush.msra.mxu0 %v1000
    %1018 = vmatpush.msra.mxu0 %v999
    %1019 = vmatpush.msra.mxu0 %v998
    %1020 = vmatpush.msra.mxu0 %v997
    %1021 = vmatpush.msra.mxu0 %v996
    %1022 = vmatpush.msra.mxu0 %v995
    %1023 = vmatpush.msra.mxu0 %v994
    %1024 = vmatpush.msra.mxu0 %v993
    %1025 = vmatmul.f32.gmra.mxu0 %v988
    %v1026 = vpop.f32.mrf.mxu0
    %v1027 = vadd.f32 0.0, %v1026
    %1028 = vmatmul.f32.gmra.mxu0 %v989
    %v1029 = vpop.f32.mrf.mxu0
    %v1030 = vadd.f32 0.0, %v1029
    %1031 = vmatmul.f32.gmra.mxu0 %v990
    %v1032 = vpop.f32.mrf.mxu0
    %v1033 = vadd.f32 0.0, %v1032
    %1034 = vmatmul.f32.gmra.mxu0 %v991
    %v1035 = vpop.f32.mrf.mxu0
    %v1036 = vadd.f32 0.0, %v1035
    %1037 = vdwg.mxu0
    %1038 = vmatpush.msra.mxu0 %v987
    %1039 = vmatpush.msra.mxu0 %v986
    %1040 = vmatpush.msra.mxu0 %v985
    %1041 = vmatpush.msra.mxu0 %v984
    %1042 = vmatpush.msra.mxu0 %v983
    %1043 = vmatpush.msra.mxu0 %v982
    %1044 = vmatpush.msra.mxu0 %v981
    %1045 = vmatpush.msra.mxu0 %v980
    %1046 = vmatpush.msra.mxu0 %v979
    %1047 = vmatpush.msra.mxu0 %v978
    %1048 = vmatpush.msra.mxu0 %v977
    %1049 = vmatpush.msra.mxu0 %v976
    %1050 = vmatpush.msra.mxu0 %v975
    %1051 = vmatpush.msra.mxu0 %v974
    %1052 = vmatpush.msra.mxu0 %v973
    %1053 = vmatpush.msra.mxu0 %v972
    %1054 = vmatmul.f32.gmra.mxu0 %v967
    %v1055 = vpop.f32.mrf.mxu0
    %v1056 = vadd.f32 %v1027, %v1055
    %1057 = vmatmul.f32.gmra.mxu0 %v968
    %v1058 = vpop.f32.mrf.mxu0
    %v1059 = vadd.f32 %v1030, %v1058
    %1060 = vmatmul.f32.gmra.mxu0 %v969
    %v1061 = vpop.f32.mrf.mxu0
    %v1062 = vadd.f32 %v1033, %v1061
    %1063 = vmatmul.f32.gmra.mxu0 %v970
    %v1064 = vpop.f32.mrf.mxu0
    %v1065 = vadd.f32 %v1036, %v1064
    %1066 = vdwg.mxu0
    %v1067 = vld [vmem:[#allocation2 + $0x2] sm:$0xff]
    %v1068 = vld [vmem:[#allocation2 + $0xa] sm:$0xff]
    %v1069 = vld [vmem:[#allocation2 + $0x1a] sm:$0xff]
    %v1070 = vld [vmem:[#allocation2 + $0x22] sm:$0xff]
    %s1071 = scalar_lea.vmem [#allocation6], 1408
    %v1072 = vld [vmem:[%s1071] sm:$0xff]
    %v1073 = vld [vmem:[%s1071 + $0x8] sm:$0xff]
    %v1074 = vld [vmem:[%s1071 + $0x10] sm:$0xff]
    %v1075 = vld [vmem:[%s1071 + $0x18] sm:$0xff]
    %v1076 = vld [vmem:[%s1071 + $0x20] sm:$0xff]
    %v1077 = vld [vmem:[%s1071 + $0x28] sm:$0xff]
    %v1078 = vld [vmem:[%s1071 + $0x30] sm:$0xff]
    %v1079 = vld [vmem:[%s1071 + $0x38] sm:$0xff]
    %v1080 = vld [vmem:[%s1071 + $0x40] sm:$0xff]
    %v1081 = vld [vmem:[%s1071 + $0x48] sm:$0xff]
    %v1082 = vld [vmem:[%s1071 + $0x50] sm:$0xff]
    %v1083 = vld [vmem:[%s1071 + $0x58] sm:$0xff]
    %v1084 = vld [vmem:[%s1071 + $0x60] sm:$0xff]
    %v1085 = vld [vmem:[%s1071 + $0x68] sm:$0xff]
    %v1086 = vld [vmem:[%s1071 + $0x70] sm:$0xff]
    %v1087 = vld [vmem:[%s1071 + $0x78] sm:$0xff]
    %1088 = vmatpush.msra.mxu0 %v1087
    %1089 = vmatpush.msra.mxu0 %v1086
    %1090 = vmatpush.msra.mxu0 %v1085
    %1091 = vmatpush.msra.mxu0 %v1084
    %1092 = vmatpush.msra.mxu0 %v1083
    %1093 = vmatpush.msra.mxu0 %v1082
    %1094 = vmatpush.msra.mxu0 %v1081
    %1095 = vmatpush.msra.mxu0 %v1080
    %1096 = vmatpush.msra.mxu0 %v1079
    %1097 = vmatpush.msra.mxu0 %v1078
    %1098 = vmatpush.msra.mxu0 %v1077
    %1099 = vmatpush.msra.mxu0 %v1076
    %1100 = vmatpush.msra.mxu0 %v1075
    %1101 = vmatpush.msra.mxu0 %v1074
    %1102 = vmatpush.msra.mxu0 %v1073
    %1103 = vmatpush.msra.mxu0 %v1072
    %1104 = vmatmul.f32.gmra.mxu0 %v1067
    %v1105 = vpop.f32.mrf.mxu0
    %v1106 = vadd.f32 0.0, %v1105
    %1107 = vmatmul.f32.gmra.mxu0 %v1068
    %v1108 = vpop.f32.mrf.mxu0
    %v1109 = vadd.f32 0.0, %v1108
    %1110 = vmatmul.f32.gmra.mxu0 %v1069
    %v1111 = vpop.f32.mrf.mxu0
    %v1112 = vadd.f32 0.0, %v1111
    %1113 = vmatmul.f32.gmra.mxu0 %v1070
    %v1114 = vpop.f32.mrf.mxu0
    %v1115 = vadd.f32 0.0, %v1114
    %1116 = vdwg.mxu0
    %v1117 = vadd.f32 %v1056, %v1106
    %v1118 = vadd.f32 %v1059, %v1109
    %v1119 = vadd.f32 %v1062, %v1112
    %v1120 = vadd.f32 %v1065, %v1115
    %v1121 = vld [vmem:[#allocation8 + $0x3] sm:$0x1]
    %v1122 = vperm.slane %v1121, 0
    %v1123 = vadd.f32 %v1117, %v1122
    %v1124 = vadd.f32 %v1118, %v1122
    %v1125 = vadd.f32 %v1119, %v1122
    %v1126 = vadd.f32 %v1120, %v1122
    %v1127 = vadd.f32 %v1123, %v959
    %v1128 = vadd.f32 %v1124, %v960
    %v1129 = vadd.f32 %v1125, %v961
    %v1130 = vadd.f32 %v1126, %v962
    %v1131 = vadd.f32 %v1127, %v1128
    %v1132 = vadd.f32 %v1131, %v1129
    %v1133 = vadd.f32 %v1132, %v1130
    %v1134 = vrot.slane %v1133, 4
    %v1135 = vadd.f32 %v1133, %v1134
    %v1136 = vrot.slane %v1135, 2
    %v1137 = vadd.f32 %v1135, %v1136
    %v1138 = vrot.slane %v1137, 1
    %v1139 = vadd.f32 %v1137, %v1138
    %v1140 = vmul.f32 %v1127, %v1127
    %v1141 = vmul.f32 %v1128, %v1128
    %v1142 = vmul.f32 %v1129, %v1129
    %v1143 = vmul.f32 %v1130, %v1130
    %v1144 = vadd.f32 %v1140, %v1141
    %v1145 = vadd.f32 %v1144, %v1142
    %v1146 = vadd.f32 %v1145, %v1143
    %v1147 = vrot.slane %v1146, 4
    %v1148 = vadd.f32 %v1146, %v1147
    %v1149 = vrot.slane %v1148, 2
    %v1150 = vadd.f32 %v1148, %v1149
    %v1151 = vrot.slane %v1150, 1
    %v1152 = vadd.f32 %v1150, %v1151
    %v1153 = vld [vmem:[#allocation12] sm:$0xff]
    %v1154 = vld [vmem:[#allocation12 + $0x8] sm:$0xff]
    %v1155 = vld [vmem:[#allocation12 + $0x10] sm:$0xff]
    %v1156 = vld [vmem:[#allocation12 + $0x18] sm:$0xff]
    %v1157 = vld [vmem:[#allocation12 + $0x20] sm:$0xff]
    %v1158 = vld [vmem:[#allocation12 + $0x28] sm:$0xff]
    %v1159 = vld [vmem:[#allocation12 + $0x30] sm:$0xff]
    %v1160 = vld [vmem:[#allocation12 + $0x38] sm:$0xff]
    %v1161 = vld [vmem:[#allocation12 + $0x40] sm:$0xff]
    %v1162 = vld [vmem:[#allocation12 + $0x48] sm:$0xff]
    %v1163 = vld [vmem:[#allocation12 + $0x50] sm:$0xff]
    %v1164 = vld [vmem:[#allocation12 + $0x58] sm:$0xff]
    %v1165 = vld [vmem:[#allocation12 + $0x60] sm:$0xff]
    %v1166 = vld [vmem:[#allocation12 + $0x68] sm:$0xff]
    %v1167 = vld [vmem:[#allocation12 + $0x70] sm:$0xff]
    %v1168 = vld [vmem:[#allocation12 + $0x78] sm:$0xff]
    %1169 = vmatpush.msra.mxu0 %v1168
    %1170 = vmatpush.msra.mxu0 %v1167
    %1171 = vmatpush.msra.mxu0 %v1166
    %1172 = vmatpush.msra.mxu0 %v1165
    %1173 = vmatpush.msra.mxu0 %v1164
    %1174 = vmatpush.msra.mxu0 %v1163
    %1175 = vmatpush.msra.mxu0 %v1162
    %1176 = vmatpush.msra.mxu0 %v1161
    %1177 = vmatpush.msra.mxu0 %v1160
    %1178 = vmatpush.msra.mxu0 %v1159
    %1179 = vmatpush.msra.mxu0 %v1158
    %1180 = vmatpush.msra.mxu0 %v1157
    %1181 = vmatpush.msra.mxu0 %v1156
    %1182 = vmatpush.msra.mxu0 %v1155
    %1183 = vmatpush.msra.mxu0 %v1154
    %1184 = vmatpush.msra.mxu0 %v1153
    %1185 = vmatmul.f32.gmra.mxu0 %v1139
    %v1186 = vpop.f32.mrf.mxu0
    %v1187 = vadd.f32 0.0, %v1186
    %1188 = vdwg.mxu0
    %1189 = vmatpush.msra.mxu0 %v1168
    %1190 = vmatpush.msra.mxu0 %v1167
    %1191 = vmatpush.msra.mxu0 %v1166
    %1192 = vmatpush.msra.mxu0 %v1165
    %1193 = vmatpush.msra.mxu0 %v1164
    %1194 = vmatpush.msra.mxu0 %v1163
    %1195 = vmatpush.msra.mxu0 %v1162
    %1196 = vmatpush.msra.mxu0 %v1161
    %1197 = vmatpush.msra.mxu0 %v1160
    %1198 = vmatpush.msra.mxu0 %v1159
    %1199 = vmatpush.msra.mxu0 %v1158
    %1200 = vmatpush.msra.mxu0 %v1157
    %1201 = vmatpush.msra.mxu0 %v1156
    %1202 = vmatpush.msra.mxu0 %v1155
    %1203 = vmatpush.msra.mxu0 %v1154
    %1204 = vmatpush.msra.mxu0 %v1153
    %1205 = vmatmul.f32.gmra.mxu0 %v1152
    %v1206 = vpop.f32.mrf.mxu0
    %v1207 = vadd.f32 0.0, %v1206
    %1208 = vdwg.mxu0
    %v1209 = vmul.f32 %v1187, 0.001953125
    %v1210 = vmul.f32 %v1207, 0.001953125
    %v1211 = vmul.f32 %v1209, %v1209
    %v1212 = vsub.f32 %v1210, %v1211
    %v1213 = vld [vmem:[#allocation9 + $0x3] sm:$0x1]
    %v1214 = vadd.f32 %v1212, 1e-05
    %v1215 = vrsqrt.pop %v1214
    %v1216 = vmul.f32 %v1215, %v1214
    %v1217 = vmul.f32 %v1216, %v1215
    %v1218 = vmul.f32 0.5, %v1217
    %v1219 = vsub.f32 1.5, %v1218
    %v1220 = vmul.f32 %v1215, %v1219
    %vm1221 = vweird.f32 %v1214
    %vm1222 = vweird.f32 %v1215
    %vm1223 = vmor %vm1221, %vm1222
    %v1224 = vsel %vm1223, %v1215, %v1220
    %v1225 = vmul.f32 %v1213, %v1224
    %v1226 = vld [vmem:[#allocation11 + $0x3] sm:$0x1]
    %v1227 = vmul.f32 %v1209, %v1225
    %v1228 = vsub.f32 %v1226, %v1227
    %v1229 = vperm.slane %v1225, 0
    %v1230 = vmul.f32 %v1127, %v1229
    %v1231 = vmul.f32 %v1128, %v1229
    %v1232 = vmul.f32 %v1129, %v1229
    %v1233 = vmul.f32 %v1130, %v1229
    %v1234 = vperm.slane %v1228, 0
    %v1235 = vadd.f32 %v1230, %v1234
    %v1236 = vadd.f32 %v1231, %v1234
    %v1237 = vadd.f32 %v1232, %v1234
    %v1238 = vadd.f32 %v1233, %v1234
    %v1239 = vmax.f32 %v1235, 0.0
    %v1240 = vmax.f32 %v1236, 0.0
    %v1241 = vmax.f32 %v1237, 0.0
    %v1242 = vmax.f32 %v1238, 0.0
    %1243 = vst [vmem:[#allocation14] sm:$0xff] %v1239
    %1244 = vst [vmem:[#allocation14 + $0x8] sm:$0xff] %v1240
    %1245 = vst [vmem:[#allocation14 + $0x10] sm:$0xff] %v1241
    %1246 = vst [vmem:[#allocation14 + $0x18] sm:$0xff] %v1242
    // Predicated region
    $region50: #{tpu_custom_call.1} parent=1 // pred_check
      _
    $region51: #{tpu_custom_call.1} parent=1 // pred_check_branch
      %1248 = sbr.rel (0) target = $region53
    $region52: #{tpu_custom_call.1} parent=1 // pred_region
      %1250 = vsyncadd [#allocation5], 0
      %s1251 = sshll.u32 [#allocation14], 4
      %s1252 = int_to_ptr.vmem [resolvable:$true] %s1251
      %s1253 = sshll.u32 %s6, 4
      %s1254 = int_to_ptr.hbm [resolvable:$true] %s1253
      %1259 = dma.vmem_to_hbm [thread:$0]  %s1252, 512, %s1254, [#allocation5], 128, 128, 8
    $region53: #{tpu_custom_call.1} parent=1 // pred_fallthru
      _
    // Predicated region
    $region54: #{tpu_custom_call.1} parent=1 // pred_check
      _
    $region55: #{tpu_custom_call.1} parent=1 // pred_check_branch
      %1261 = sbr.rel (0) target = $region57
    $region56: #{tpu_custom_call.1} parent=1 // pred_region
      %1263 = dma.done [#allocation5], 512
    $region57: #{tpu_custom_call.1} parent=1 // pred_fallthru
      _
    %1264 = vsyncpa [#allocation4], 1
    %1265 = vsyncpa [#allocation7], 1
    %1266 = vsyncpa [#allocation10], 1
    %1267 = vsyncpa [#allocation13], 1
    %1268 = vsyncpa [#allocation5], 1

</llo_original>
